<compile_context>
chip_gen: v6e
topology: v6e:2x2x1
jax: 0.10.0
libtpu: 0.0.40
codegen_flags: <defaults>
</compile_context>

<pallas_src>
import jax
import jax.numpy as jnp
from jax.experimental import pallas as pl
from jax.experimental.pallas import tpu as pltpu


# ----------------------------------------------------------------------------
# Fused kernel (factory closes over static shapes / layer count)
# ----------------------------------------------------------------------------
def _make_fused_lstm_fc_kernel(B, T, D_in, H, num_layers):
    H4 = 4 * H

    def lstm_cell(gates, c_prev):
        # Kernel gate order: [i, f, o, g]  (reordered from PyTorch's [i,f,g,o]
        # at init).  Sigmoid on one contiguous (B, 3H) slice, tanh on (B, H).
        sig = jax.nn.sigmoid(gates[:, 0:3 * H])
        i_g = sig[:, 0 * H:1 * H]
        f_g = sig[:, 1 * H:2 * H]
        o_g = sig[:, 2 * H:3 * H]
        g_g = jnp.tanh(gates[:, 3 * H:4 * H])
        c_new = f_g * c_prev + i_g * g_g
        h_new = o_g * jnp.tanh(c_new)
        return h_new, c_new

    def kernel(*refs):
        # inputs : x2d, [w_ih_l, w_hh_l, b_l] * L, fc_w, fc_b
        # outputs: out ; scratch: xg
        x_ref = refs[0]
        layer_refs = refs[1:1 + 3 * num_layers]
        fc_w_ref = refs[1 + 3 * num_layers]
        fc_b_ref = refs[2 + 3 * num_layers]
        out_ref = refs[3 + 3 * num_layers]
        xg_ref = refs[4 + 3 * num_layers]

        # Hoist all weight loads out of the recurrence (loop-invariant).
        w_ih = [layer_refs[3 * l + 0][...] for l in range(num_layers)]
        w_hh = [layer_refs[3 * l + 1][...] for l in range(num_layers)]
        b = [layer_refs[3 * l + 2][...] for l in range(num_layers)]
        wdt = w_ih[0].dtype

        # ---- Phase 1: hoisted layer-0 input projection, ONE MXU call covering
        #      all timesteps.  Rows are t-major (t*B + b) so Phase 2 reads one
        #      contiguous (B, 4H) block per step. ----
        xg_ref[...] = (
            jnp.dot(x_ref[...].astype(wdt), w_ih[0],
                    preferred_element_type=jnp.float32)
            + b[0]
        )

        # ---- Phase 2: sequential recurrence, fully unrolled (T small/static).
        #      Per step: the W_hh projections of ALL layers depend only on the
        #      previous step's state, so they are issued first (off the
        #      layer-to-layer critical path); then the cell chain runs with one
        #      W_ih dot per layer. ----
        zero = jnp.zeros((B, H), jnp.float32)
        h = [zero] * num_layers
        c = [zero] * num_layers
        for t in range(T):
            hh = [
                jnp.dot(h[l].astype(wdt), w_hh[l],
                        preferred_element_type=jnp.float32)
                for l in range(num_layers)
            ]

            # Layer 0: contiguous aligned block load of this step's projections.
            gates = xg_ref[pl.ds(t * B, B), :] + hh[0]
            h[0], c[0] = lstm_cell(gates, c[0])

            # Layers 1..L-1 (inter-layer dropout is identity in eval mode).
            for l in range(1, num_layers):
                gates = (
                    jnp.dot(h[l - 1].astype(wdt), w_ih[l],
                            preferred_element_type=jnp.float32)
                    + hh[l] + b[l]
                )
                h[l], c[l] = lstm_cell(gates, c[l])

        # ---- Phase 3: Dropout(eval)=identity, FC on last timestep only. ----
        fc_w = fc_w_ref[...]
        out_ref[...] = (
            jnp.dot(h[num_layers - 1].astype(fc_w.dtype), fc_w,
                    preferred_element_type=jnp.float32)
            + fc_b_ref[...]
        ).astype(out_ref.dtype)

    return kernel


# ----------------------------------------------------------------------------
# Wrapper
# ----------------------------------------------------------------------------
@jax.jit
def lstm_model_forward(params, x):
    """x: (B, T, input_size) batch_first, like the PyTorch module -> (B, output)."""
    B, T, D_in = x.shape
    num_layers = len(params["w_ih"])
    H = params["w_hh"][0].shape[0]
    H4 = 4 * H
    O = params["fc_w"].shape[1]

    # t-major layout for the hoisted projection: (B,T,D) -> (T,B,D) -> (T*B,D).
    # A single tiny XLA transpose outside the kernel; keeps every per-step read
    # inside the kernel a contiguous (B, 4H) block.
    x2d = jnp.transpose(x, (1, 0, 2)).reshape(T * B, D_in).astype(jnp.float32)

    inputs = [x2d]
    in_specs = [pl.BlockSpec((T * B, D_in), lambda: (0, 0))]
    for l in range(num_layers):
        d = D_in if l == 0 else H
        inputs += [params["w_ih"][l], params["w_hh"][l], params["b"][l]]
        in_specs += [
            pl.BlockSpec((d, H4), lambda: (0, 0)),
            pl.BlockSpec((H, H4), lambda: (0, 0)),
            pl.BlockSpec((1, H4), lambda: (0, 0)),
        ]
    inputs += [params["fc_w"], params["fc_b"]]
    in_specs += [pl.BlockSpec((H, O), lambda: (0, 0)),
                 pl.BlockSpec((1, O), lambda: (0, 0))]

    kernel = _make_fused_lstm_fc_kernel(B, T, D_in, H, num_layers)
    return pl.pallas_call(
        kernel,
        out_shape=jax.ShapeDtypeStruct((B, O), jnp.float32),
        in_specs=in_specs,
        out_specs=pl.BlockSpec((B, O), lambda: (0, 0)),
        # Hoisted t-major layer-0 projections.  At production (H, T, B) this is
        # the first thing that breaks v7x's 64 MiB VMEM -> chunk over T / bf16.
        scratch_shapes=[pltpu.VMEM((T * B, H4), jnp.float32)],
        compiler_params=pltpu.CompilerParams(vmem_limit_bytes=32 * 1024 * 1024),
    )(*inputs)


# ----------------------------------------------------------------------------
# Parameter init (PyTorch-style U(-k, k), k = 1/sqrt(hidden_size)).
# Weights stored pre-transposed (in_dim, 4H); b_ih + b_hh pre-summed; gate
# columns reordered PyTorch [i,f,g,o] -> kernel [i,f,o,g].
# weight_dtype=jnp.bfloat16 is the v6e/v7x option (f32 accumulation kept).
# ----------------------------------------------------------------------------
def _reorder_gates_ifgo_to_ifog(w, H):
    # Column blocks [i | f | g | o] -> [i | f | o | g] along the last axis.
    i, f, g, o = (w[..., 0 * H:1 * H], w[..., 1 * H:2 * H],
                  w[..., 2 * H:3 * H], w[..., 3 * H:4 * H])
    return jnp.concatenate([i, f, o, g], axis=-1)


def init_params(key, input_size, hidden_size, num_layers, output_size,
                weight_dtype=jnp.float32):
    H, H4 = hidden_size, 4 * hidden_size
    bound = hidden_size ** -0.5
    params = {"w_ih": [], "w_hh": [], "b": []}

    for l in range(num_layers):
        d = input_size if l == 0 else H
        key, k1, k2, k3, k4 = jax.random.split(key, 5)
        w_ih = jax.random.uniform(k1, (d, H4), jnp.float32, -bound, bound)
        w_hh = jax.random.uniform(k2, (H, H4), jnp.float32, -bound, bound)
        b_ih = jax.random.uniform(k3, (H4,), jnp.float32, -bound, bound)
        b_hh = jax.random.uniform(k4, (H4,), jnp.float32, -bound, bound)
        params["w_ih"].append(
            _reorder_gates_ifgo_to_ifog(w_ih, H).astype(weight_dtype))
        params["w_hh"].append(
            _reorder_gates_ifgo_to_ifog(w_hh, H).astype(weight_dtype))
        params["b"].append(
            _reorder_gates_ifgo_to_ifog((b_ih + b_hh).reshape(1, H4), H))

    key, k1, k2 = jax.random.split(key, 3)
    params["fc_w"] = jax.random.uniform(
        k1, (H, output_size), jnp.float32, -bound, bound).astype(weight_dtype)
    params["fc_b"] = jax.random.uniform(
        k2, (1, output_size), jnp.float32, -bound, bound)
    return params


# ----------------------------------------------------------------------------
# Pure-JAX reference (same gate layout) for an in-script correctness check.
# ----------------------------------------------------------------------------
def reference_forward(params, x):
    B, T, _ = x.shape
    num_layers = len(params["w_ih"])
    H = params["w_hh"][0].shape[0]
    h = [jnp.zeros((B, H), jnp.float32) for _ in range(num_layers)]
    c = [jnp.zeros((B, H), jnp.float32) for _ in range(num_layers)]
    for t in range(T):
        inp = x[:, t, :]
        for l in range(num_layers):
            gates = (inp @ params["w_ih"][l].astype(jnp.float32)
                     + h[l] @ params["w_hh"][l].astype(jnp.float32)
                     + params["b"][l])
            i = jax.nn.sigmoid(gates[:, 0 * H:1 * H])
            f = jax.nn.sigmoid(gates[:, 1 * H:2 * H])
            o = jax.nn.sigmoid(gates[:, 2 * H:3 * H])
            g = jnp.tanh(gates[:, 3 * H:4 * H])
            c[l] = f * c[l] + i * g
            h[l] = o * jnp.tanh(c[l])
            inp = h[l]
    return h[-1] @ params["fc_w"].astype(jnp.float32) + params["fc_b"]


if __name__ == "__main__":
    # Module config (bidirectional=False; eval-mode dropout = identity).
    input_size = 16
    hidden_size = 32
    num_layers = 2
    output_size = 8
    batch = 2
    seq = 8

    key = jax.random.PRNGKey(0)
    key, pkey, xkey = jax.random.split(key, 3)
    params = init_params(pkey, input_size, hidden_size, num_layers, output_size)
    x = jax.random.normal(xkey, (batch, seq, input_size), jnp.float32)

    # TODO(synk): training-mode Dropout (RNG masks) not implemented; eval semantics only.
    out = lstm_model_forward(params, x)
    jax.block_until_ready(out)
    assert out.shape == (batch, output_size)

    ref = reference_forward(params, x)
    assert jnp.allclose(out, ref, atol=1e-5, rtol=1e-5), (
        f"max abs err = {jnp.max(jnp.abs(out - ref))}")
    print("KERNEL_OK")
</pallas_src>

<mosaic_0001>
module attributes {stable_mosaic.version = 11 : i64} {
  func.func @kernel(%arg0: memref<16x16xf32, #tpu.memory_space<vmem>>, %arg1: memref<16x128xf32, #tpu.memory_space<vmem>>, %arg2: memref<32x128xf32, #tpu.memory_space<vmem>>, %arg3: memref<1x128xf32, #tpu.memory_space<vmem>>, %arg4: memref<32x128xf32, #tpu.memory_space<vmem>>, %arg5: memref<32x128xf32, #tpu.memory_space<vmem>>, %arg6: memref<1x128xf32, #tpu.memory_space<vmem>>, %arg7: memref<32x8xf32, #tpu.memory_space<vmem>>, %arg8: memref<1x8xf32, #tpu.memory_space<vmem>>, %arg9: memref<2x8xf32, #tpu.memory_space<vmem>>, %arg10: memref<16x128xf32, #tpu.memory_space<vmem>>) attributes {dimension_semantics = [], scalar_prefetch = 0 : i64, scratch_operands = 1 : i64, tpu.core_type = #tpu.core_type<tc>} {
    %c0 = arith.constant 0 : index
    %c0_0 = arith.constant 0 : index
    %0 = vector.load %arg1[%c0, %c0_0] : memref<16x128xf32, #tpu.memory_space<vmem>>, vector<16x128xf32>
    %c0_1 = arith.constant 0 : index
    %c0_2 = arith.constant 0 : index
    %1 = vector.load %arg4[%c0_1, %c0_2] : memref<32x128xf32, #tpu.memory_space<vmem>>, vector<32x128xf32>
    %c0_3 = arith.constant 0 : index
    %c0_4 = arith.constant 0 : index
    %2 = vector.load %arg2[%c0_3, %c0_4] : memref<32x128xf32, #tpu.memory_space<vmem>>, vector<32x128xf32>
    %c0_5 = arith.constant 0 : index
    %c0_6 = arith.constant 0 : index
    %3 = vector.load %arg5[%c0_5, %c0_6] : memref<32x128xf32, #tpu.memory_space<vmem>>, vector<32x128xf32>
    %c0_7 = arith.constant 0 : index
    %c0_8 = arith.constant 0 : index
    %4 = vector.load %arg3[%c0_7, %c0_8] : memref<1x128xf32, #tpu.memory_space<vmem>>, vector<1x128xf32>
    %c0_9 = arith.constant 0 : index
    %c0_10 = arith.constant 0 : index
    %5 = vector.load %arg6[%c0_9, %c0_10] : memref<1x128xf32, #tpu.memory_space<vmem>>, vector<1x128xf32>
    %c0_11 = arith.constant 0 : index
    %c0_12 = arith.constant 0 : index
    %6 = vector.load %arg0[%c0_11, %c0_12] : memref<16x16xf32, #tpu.memory_space<vmem>>, vector<16x16xf32>
    %cst = arith.constant dense<0.000000e+00> : vector<16x128xf32>
    %7 = tpu.matmul %6, %0, %cst {dimension_numbers = #tpu.dot_dimension_numbers<[1], [0], [0], [1], [0, 0, 1, 1], [], []>} : vector<16x16xf32>, vector<16x128xf32>, vector<16x128xf32> -> vector<16x128xf32>
    %8 = vector.broadcast %4 : vector<1x128xf32> to vector<16x128xf32>
    %9 = arith.addf %7, %8 : vector<16x128xf32>
    %c0_13 = arith.constant 0 : index
    %c0_14 = arith.constant 0 : index
    %10 = vector.load %arg10[%c0_13, %c0_14] : memref<16x128xf32, #tpu.memory_space<vmem>>, vector<16x128xf32>
    tpu.vector_store %arg10[%c0_13, %c0_14], %9 {strides = array<i32>} : memref<16x128xf32, #tpu.memory_space<vmem>>, vector<16x128xf32>,
    %cst_15 = arith.constant 0.000000e+00 : f32
    %11 = vector.broadcast %cst_15 : f32 to vector<2x32xf32>
    %cst_16 = arith.constant dense<0.000000e+00> : vector<2x128xf32>
    %12 = tpu.matmul %11, %2, %cst_16 {dimension_numbers = #tpu.dot_dimension_numbers<[1], [0], [0], [1], [0, 0, 1, 1], [], []>} : vector<2x32xf32>, vector<32x128xf32>, vector<2x128xf32> -> vector<2x128xf32>
    %cst_17 = arith.constant dense<0.000000e+00> : vector<2x128xf32>
    %13 = tpu.matmul %11, %3, %cst_17 {dimension_numbers = #tpu.dot_dimension_numbers<[1], [0], [0], [1], [0, 0, 1, 1], [], []>} : vector<2x32xf32>, vector<32x128xf32>, vector<2x128xf32> -> vector<2x128xf32>
    %c0_18 = arith.constant 0 : index
    %c0_19 = arith.constant 0 : index
    %14 = vector.load %arg10[%c0_18, %c0_19] : memref<16x128xf32, #tpu.memory_space<vmem>>, vector<2x128xf32>
    %15 = arith.addf %14, %12 : vector<2x128xf32>
    %16 = vector.extract_strided_slice %15 {offsets = [0, 0], sizes = [2, 96], strides = [1, 1]} : vector<2x128xf32> to vector<2x96xf32>
    %17 = arith.negf %16 : vector<2x96xf32>
    %18 = math.exp %17 : vector<2x96xf32>
    %cst_20 = arith.constant 1.000000e+00 : f32
    %19 = vector.broadcast %cst_20 : f32 to vector<2x96xf32>
    %20 = arith.addf %19, %18 : vector<2x96xf32>
    %21 = arith.divf %19, %20 : vector<2x96xf32>
    %22 = vector.extract_strided_slice %21 {offsets = [0, 0], sizes = [2, 32], strides = [1, 1]} : vector<2x96xf32> to vector<2x32xf32>
    %23 = vector.extract_strided_slice %21 {offsets = [0, 32], sizes = [2, 32], strides = [1, 1]} : vector<2x96xf32> to vector<2x32xf32>
    %24 = vector.extract_strided_slice %21 {offsets = [0, 64], sizes = [2, 32], strides = [1, 1]} : vector<2x96xf32> to vector<2x32xf32>
    %25 = vector.extract_strided_slice %15 {offsets = [0, 96], sizes = [2, 32], strides = [1, 1]} : vector<2x128xf32> to vector<2x32xf32>
    %26 = math.tanh %25 : vector<2x32xf32>
    %27 = arith.mulf %23, %11 : vector<2x32xf32>
    %28 = arith.mulf %22, %26 : vector<2x32xf32>
    %29 = arith.addf %27, %28 : vector<2x32xf32>
    %30 = math.tanh %29 : vector<2x32xf32>
    %31 = arith.mulf %24, %30 : vector<2x32xf32>
    %cst_21 = arith.constant dense<0.000000e+00> : vector<2x128xf32>
    %32 = tpu.matmul %31, %1, %cst_21 {dimension_numbers = #tpu.dot_dimension_numbers<[1], [0], [0], [1], [0, 0, 1, 1], [], []>} : vector<2x32xf32>, vector<32x128xf32>, vector<2x128xf32> -> vector<2x128xf32>
    %33 = arith.addf %32, %13 : vector<2x128xf32>
    %34 = vector.broadcast %5 : vector<1x128xf32> to vector<2x128xf32>
    %35 = arith.addf %33, %34 : vector<2x128xf32>
    %36 = vector.extract_strided_slice %35 {offsets = [0, 0], sizes = [2, 96], strides = [1, 1]} : vector<2x128xf32> to vector<2x96xf32>
    %37 = arith.negf %36 : vector<2x96xf32>
    %38 = math.exp %37 : vector<2x96xf32>
    %cst_22 = arith.constant 1.000000e+00 : f32
    %39 = vector.broadcast %cst_22 : f32 to vector<2x96xf32>
    %40 = arith.addf %39, %38 : vector<2x96xf32>
    %41 = arith.divf %39, %40 : vector<2x96xf32>
    %42 = vector.extract_strided_slice %41 {offsets = [0, 0], sizes = [2, 32], strides = [1, 1]} : vector<2x96xf32> to vector<2x32xf32>
    %43 = vector.extract_strided_slice %41 {offsets = [0, 32], sizes = [2, 32], strides = [1, 1]} : vector<2x96xf32> to vector<2x32xf32>
    %44 = vector.extract_strided_slice %41 {offsets = [0, 64], sizes = [2, 32], strides = [1, 1]} : vector<2x96xf32> to vector<2x32xf32>
    %45 = vector.extract_strided_slice %35 {offsets = [0, 96], sizes = [2, 32], strides = [1, 1]} : vector<2x128xf32> to vector<2x32xf32>
    %46 = math.tanh %45 : vector<2x32xf32>
    %47 = arith.mulf %43, %11 : vector<2x32xf32>
    %48 = arith.mulf %42, %46 : vector<2x32xf32>
    %49 = arith.addf %47, %48 : vector<2x32xf32>
    %50 = math.tanh %49 : vector<2x32xf32>
    %51 = arith.mulf %44, %50 : vector<2x32xf32>
    %cst_23 = arith.constant dense<0.000000e+00> : vector<2x128xf32>
    %52 = tpu.matmul %31, %2, %cst_23 {dimension_numbers = #tpu.dot_dimension_numbers<[1], [0], [0], [1], [0, 0, 1, 1], [], []>} : vector<2x32xf32>, vector<32x128xf32>, vector<2x128xf32> -> vector<2x128xf32>
    %cst_24 = arith.constant dense<0.000000e+00> : vector<2x128xf32>
    %53 = tpu.matmul %51, %3, %cst_24 {dimension_numbers = #tpu.dot_dimension_numbers<[1], [0], [0], [1], [0, 0, 1, 1], [], []>} : vector<2x32xf32>, vector<32x128xf32>, vector<2x128xf32> -> vector<2x128xf32>
    %c2 = arith.constant 2 : index
    %c0_25 = arith.constant 0 : index
    %54 = vector.load %arg10[%c2, %c0_25] : memref<16x128xf32, #tpu.memory_space<vmem>>, vector<2x128xf32>
    %55 = arith.addf %54, %52 : vector<2x128xf32>
    %56 = vector.extract_strided_slice %55 {offsets = [0, 0], sizes = [2, 96], strides = [1, 1]} : vector<2x128xf32> to vector<2x96xf32>
    %57 = arith.negf %56 : vector<2x96xf32>
    %58 = math.exp %57 : vector<2x96xf32>
    %cst_26 = arith.constant 1.000000e+00 : f32
    %59 = vector.broadcast %cst_26 : f32 to vector<2x96xf32>
    %60 = arith.addf %59, %58 : vector<2x96xf32>
    %61 = arith.divf %59, %60 : vector<2x96xf32>
    %62 = vector.extract_strided_slice %61 {offsets = [0, 0], sizes = [2, 32], strides = [1, 1]} : vector<2x96xf32> to vector<2x32xf32>
    %63 = vector.extract_strided_slice %61 {offsets = [0, 32], sizes = [2, 32], strides = [1, 1]} : vector<2x96xf32> to vector<2x32xf32>
    %64 = vector.extract_strided_slice %61 {offsets = [0, 64], sizes = [2, 32], strides = [1, 1]} : vector<2x96xf32> to vector<2x32xf32>
    %65 = vector.extract_strided_slice %55 {offsets = [0, 96], sizes = [2, 32], strides = [1, 1]} : vector<2x128xf32> to vector<2x32xf32>
    %66 = math.tanh %65 : vector<2x32xf32>
    %67 = arith.mulf %63, %29 : vector<2x32xf32>
    %68 = arith.mulf %62, %66 : vector<2x32xf32>
    %69 = arith.addf %67, %68 : vector<2x32xf32>
    %70 = math.tanh %69 : vector<2x32xf32>
    %71 = arith.mulf %64, %70 : vector<2x32xf32>
    %cst_27 = arith.constant dense<0.000000e+00> : vector<2x128xf32>
    %72 = tpu.matmul %71, %1, %cst_27 {dimension_numbers = #tpu.dot_dimension_numbers<[1], [0], [0], [1], [0, 0, 1, 1], [], []>} : vector<2x32xf32>, vector<32x128xf32>, vector<2x128xf32> -> vector<2x128xf32>
    %73 = arith.addf %72, %53 : vector<2x128xf32>
    %74 = vector.broadcast %5 : vector<1x128xf32> to vector<2x128xf32>
    %75 = arith.addf %73, %74 : vector<2x128xf32>
    %76 = vector.extract_strided_slice %75 {offsets = [0, 0], sizes = [2, 96], strides = [1, 1]} : vector<2x128xf32> to vector<2x96xf32>
    %77 = arith.negf %76 : vector<2x96xf32>
    %78 = math.exp %77 : vector<2x96xf32>
    %cst_28 = arith.constant 1.000000e+00 : f32
    %79 = vector.broadcast %cst_28 : f32 to vector<2x96xf32>
    %80 = arith.addf %79, %78 : vector<2x96xf32>
    %81 = arith.divf %79, %80 : vector<2x96xf32>
    %82 = vector.extract_strided_slice %81 {offsets = [0, 0], sizes = [2, 32], strides = [1, 1]} : vector<2x96xf32> to vector<2x32xf32>
    %83 = vector.extract_strided_slice %81 {offsets = [0, 32], sizes = [2, 32], strides = [1, 1]} : vector<2x96xf32> to vector<2x32xf32>
    %84 = vector.extract_strided_slice %81 {offsets = [0, 64], sizes = [2, 32], strides = [1, 1]} : vector<2x96xf32> to vector<2x32xf32>
    %85 = vector.extract_strided_slice %75 {offsets = [0, 96], sizes = [2, 32], strides = [1, 1]} : vector<2x128xf32> to vector<2x32xf32>
    %86 = math.tanh %85 : vector<2x32xf32>
    %87 = arith.mulf %83, %49 : vector<2x32xf32>
    %88 = arith.mulf %82, %86 : vector<2x32xf32>
    %89 = arith.addf %87, %88 : vector<2x32xf32>
    %90 = math.tanh %89 : vector<2x32xf32>
    %91 = arith.mulf %84, %90 : vector<2x32xf32>
    %cst_29 = arith.constant dense<0.000000e+00> : vector<2x128xf32>
    %92 = tpu.matmul %71, %2, %cst_29 {dimension_numbers = #tpu.dot_dimension_numbers<[1], [0], [0], [1], [0, 0, 1, 1], [], []>} : vector<2x32xf32>, vector<32x128xf32>, vector<2x128xf32> -> vector<2x128xf32>
    %cst_30 = arith.constant dense<0.000000e+00> : vector<2x128xf32>
    %93 = tpu.matmul %91, %3, %cst_30 {dimension_numbers = #tpu.dot_dimension_numbers<[1], [0], [0], [1], [0, 0, 1, 1], [], []>} : vector<2x32xf32>, vector<32x128xf32>, vector<2x128xf32> -> vector<2x128xf32>
    %c4 = arith.constant 4 : index
    %c0_31 = arith.constant 0 : index
    %94 = vector.load %arg10[%c4, %c0_31] : memref<16x128xf32, #tpu.memory_space<vmem>>, vector<2x128xf32>
    %95 = arith.addf %94, %92 : vector<2x128xf32>
    %96 = vector.extract_strided_slice %95 {offsets = [0, 0], sizes = [2, 96], strides = [1, 1]} : vector<2x128xf32> to vector<2x96xf32>
    %97 = arith.negf %96 : vector<2x96xf32>
    %98 = math.exp %97 : vector<2x96xf32>
    %cst_32 = arith.constant 1.000000e+00 : f32
    %99 = vector.broadcast %cst_32 : f32 to vector<2x96xf32>
    %100 = arith.addf %99, %98 : vector<2x96xf32>
    %101 = arith.divf %99, %100 : vector<2x96xf32>
    %102 = vector.extract_strided_slice %101 {offsets = [0, 0], sizes = [2, 32], strides = [1, 1]} : vector<2x96xf32> to vector<2x32xf32>
    %103 = vector.extract_strided_slice %101 {offsets = [0, 32], sizes = [2, 32], strides = [1, 1]} : vector<2x96xf32> to vector<2x32xf32>
    %104 = vector.extract_strided_slice %101 {offsets = [0, 64], sizes = [2, 32], strides = [1, 1]} : vector<2x96xf32> to vector<2x32xf32>
    %105 = vector.extract_strided_slice %95 {offsets = [0, 96], sizes = [2, 32], strides = [1, 1]} : vector<2x128xf32> to vector<2x32xf32>
    %106 = math.tanh %105 : vector<2x32xf32>
    %107 = arith.mulf %103, %69 : vector<2x32xf32>
    %108 = arith.mulf %102, %106 : vector<2x32xf32>
    %109 = arith.addf %107, %108 : vector<2x32xf32>
    %110 = math.tanh %109 : vector<2x32xf32>
    %111 = arith.mulf %104, %110 : vector<2x32xf32>
    %cst_33 = arith.constant dense<0.000000e+00> : vector<2x128xf32>
    %112 = tpu.matmul %111, %1, %cst_33 {dimension_numbers = #tpu.dot_dimension_numbers<[1], [0], [0], [1], [0, 0, 1, 1], [], []>} : vector<2x32xf32>, vector<32x128xf32>, vector<2x128xf32> -> vector<2x128xf32>
    %113 = arith.addf %112, %93 : vector<2x128xf32>
    %114 = vector.broadcast %5 : vector<1x128xf32> to vector<2x128xf32>
    %115 = arith.addf %113, %114 : vector<2x128xf32>
    %116 = vector.extract_strided_slice %115 {offsets = [0, 0], sizes = [2, 96], strides = [1, 1]} : vector<2x128xf32> to vector<2x96xf32>
    %117 = arith.negf %116 : vector<2x96xf32>
    %118 = math.exp %117 : vector<2x96xf32>
    %cst_34 = arith.constant 1.000000e+00 : f32
    %119 = vector.broadcast %cst_34 : f32 to vector<2x96xf32>
    %120 = arith.addf %119, %118 : vector<2x96xf32>
    %121 = arith.divf %119, %120 : vector<2x96xf32>
    %122 = vector.extract_strided_slice %121 {offsets = [0, 0], sizes = [2, 32], strides = [1, 1]} : vector<2x96xf32> to vector<2x32xf32>
    %123 = vector.extract_strided_slice %121 {offsets = [0, 32], sizes = [2, 32], strides = [1, 1]} : vector<2x96xf32> to vector<2x32xf32>
    %124 = vector.extract_strided_slice %121 {offsets = [0, 64], sizes = [2, 32], strides = [1, 1]} : vector<2x96xf32> to vector<2x32xf32>
    %125 = vector.extract_strided_slice %115 {offsets = [0, 96], sizes = [2, 32], strides = [1, 1]} : vector<2x128xf32> to vector<2x32xf32>
    %126 = math.tanh %125 : vector<2x32xf32>
    %127 = arith.mulf %123, %89 : vector<2x32xf32>
    %128 = arith.mulf %122, %126 : vector<2x32xf32>
    %129 = arith.addf %127, %128 : vector<2x32xf32>
    %130 = math.tanh %129 : vector<2x32xf32>
    %131 = arith.mulf %124, %130 : vector<2x32xf32>
    %cst_35 = arith.constant dense<0.000000e+00> : vector<2x128xf32>
    %132 = tpu.matmul %111, %2, %cst_35 {dimension_numbers = #tpu.dot_dimension_numbers<[1], [0], [0], [1], [0, 0, 1, 1], [], []>} : vector<2x32xf32>, vector<32x128xf32>, vector<2x128xf32> -> vector<2x128xf32>
    %cst_36 = arith.constant dense<0.000000e+00> : vector<2x128xf32>
    %133 = tpu.matmul %131, %3, %cst_36 {dimension_numbers = #tpu.dot_dimension_numbers<[1], [0], [0], [1], [0, 0, 1, 1], [], []>} : vector<2x32xf32>, vector<32x128xf32>, vector<2x128xf32> -> vector<2x128xf32>
    %c6 = arith.constant 6 : index
    %c0_37 = arith.constant 0 : index
    %134 = vector.load %arg10[%c6, %c0_37] : memref<16x128xf32, #tpu.memory_space<vmem>>, vector<2x128xf32>
    %135 = arith.addf %134, %132 : vector<2x128xf32>
    %136 = vector.extract_strided_slice %135 {offsets = [0, 0], sizes = [2, 96], strides = [1, 1]} : vector<2x128xf32> to vector<2x96xf32>
    %137 = arith.negf %136 : vector<2x96xf32>
    %138 = math.exp %137 : vector<2x96xf32>
    %cst_38 = arith.constant 1.000000e+00 : f32
    %139 = vector.broadcast %cst_38 : f32 to vector<2x96xf32>
    %140 = arith.addf %139, %138 : vector<2x96xf32>
    %141 = arith.divf %139, %140 : vector<2x96xf32>
    %142 = vector.extract_strided_slice %141 {offsets = [0, 0], sizes = [2, 32], strides = [1, 1]} : vector<2x96xf32> to vector<2x32xf32>
    %143 = vector.extract_strided_slice %141 {offsets = [0, 32], sizes = [2, 32], strides = [1, 1]} : vector<2x96xf32> to vector<2x32xf32>
    %144 = vector.extract_strided_slice %141 {offsets = [0, 64], sizes = [2, 32], strides = [1, 1]} : vector<2x96xf32> to vector<2x32xf32>
    %145 = vector.extract_strided_slice %135 {offsets = [0, 96], sizes = [2, 32], strides = [1, 1]} : vector<2x128xf32> to vector<2x32xf32>
    %146 = math.tanh %145 : vector<2x32xf32>
    %147 = arith.mulf %143, %109 : vector<2x32xf32>
    %148 = arith.mulf %142, %146 : vector<2x32xf32>
    %149 = arith.addf %147, %148 : vector<2x32xf32>
    %150 = math.tanh %149 : vector<2x32xf32>
    %151 = arith.mulf %144, %150 : vector<2x32xf32>
    %cst_39 = arith.constant dense<0.000000e+00> : vector<2x128xf32>
    %152 = tpu.matmul %151, %1, %cst_39 {dimension_numbers = #tpu.dot_dimension_numbers<[1], [0], [0], [1], [0, 0, 1, 1], [], []>} : vector<2x32xf32>, vector<32x128xf32>, vector<2x128xf32> -> vector<2x128xf32>
    %153 = arith.addf %152, %133 : vector<2x128xf32>
    %154 = vector.broadcast %5 : vector<1x128xf32> to vector<2x128xf32>
    %155 = arith.addf %153, %154 : vector<2x128xf32>
    %156 = vector.extract_strided_slice %155 {offsets = [0, 0], sizes = [2, 96], strides = [1, 1]} : vector<2x128xf32> to vector<2x96xf32>
    %157 = arith.negf %156 : vector<2x96xf32>
    %158 = math.exp %157 : vector<2x96xf32>
    %cst_40 = arith.constant 1.000000e+00 : f32
    %159 = vector.broadcast %cst_40 : f32 to vector<2x96xf32>
    %160 = arith.addf %159, %158 : vector<2x96xf32>
    %161 = arith.divf %159, %160 : vector<2x96xf32>
    %162 = vector.extract_strided_slice %161 {offsets = [0, 0], sizes = [2, 32], strides = [1, 1]} : vector<2x96xf32> to vector<2x32xf32>
    %163 = vector.extract_strided_slice %161 {offsets = [0, 32], sizes = [2, 32], strides = [1, 1]} : vector<2x96xf32> to vector<2x32xf32>
    %164 = vector.extract_strided_slice %161 {offsets = [0, 64], sizes = [2, 32], strides = [1, 1]} : vector<2x96xf32> to vector<2x32xf32>
    %165 = vector.extract_strided_slice %155 {offsets = [0, 96], sizes = [2, 32], strides = [1, 1]} : vector<2x128xf32> to vector<2x32xf32>
    %166 = math.tanh %165 : vector<2x32xf32>
    %167 = arith.mulf %163, %129 : vector<2x32xf32>
    %168 = arith.mulf %162, %166 : vector<2x32xf32>
    %169 = arith.addf %167, %168 : vector<2x32xf32>
    %170 = math.tanh %169 : vector<2x32xf32>
    %171 = arith.mulf %164, %170 : vector<2x32xf32>
    %cst_41 = arith.constant dense<0.000000e+00> : vector<2x128xf32>
    %172 = tpu.matmul %151, %2, %cst_41 {dimension_numbers = #tpu.dot_dimension_numbers<[1], [0], [0], [1], [0, 0, 1, 1], [], []>} : vector<2x32xf32>, vector<32x128xf32>, vector<2x128xf32> -> vector<2x128xf32>
    %cst_42 = arith.constant dense<0.000000e+00> : vector<2x128xf32>
    %173 = tpu.matmul %171, %3, %cst_42 {dimension_numbers = #tpu.dot_dimension_numbers<[1], [0], [0], [1], [0, 0, 1, 1], [], []>} : vector<2x32xf32>, vector<32x128xf32>, vector<2x128xf32> -> vector<2x128xf32>
    %c8 = arith.constant 8 : index
    %c0_43 = arith.constant 0 : index
    %174 = vector.load %arg10[%c8, %c0_43] : memref<16x128xf32, #tpu.memory_space<vmem>>, vector<2x128xf32>
    %175 = arith.addf %174, %172 : vector<2x128xf32>
    %176 = vector.extract_strided_slice %175 {offsets = [0, 0], sizes = [2, 96], strides = [1, 1]} : vector<2x128xf32> to vector<2x96xf32>
    %177 = arith.negf %176 : vector<2x96xf32>
    %178 = math.exp %177 : vector<2x96xf32>
    %cst_44 = arith.constant 1.000000e+00 : f32
    %179 = vector.broadcast %cst_44 : f32 to vector<2x96xf32>
    %180 = arith.addf %179, %178 : vector<2x96xf32>
    %181 = arith.divf %179, %180 : vector<2x96xf32>
    %182 = vector.extract_strided_slice %181 {offsets = [0, 0], sizes = [2, 32], strides = [1, 1]} : vector<2x96xf32> to vector<2x32xf32>
    %183 = vector.extract_strided_slice %181 {offsets = [0, 32], sizes = [2, 32], strides = [1, 1]} : vector<2x96xf32> to vector<2x32xf32>
    %184 = vector.extract_strided_slice %181 {offsets = [0, 64], sizes = [2, 32], strides = [1, 1]} : vector<2x96xf32> to vector<2x32xf32>
    %185 = vector.extract_strided_slice %175 {offsets = [0, 96], sizes = [2, 32], strides = [1, 1]} : vector<2x128xf32> to vector<2x32xf32>
    %186 = math.tanh %185 : vector<2x32xf32>
    %187 = arith.mulf %183, %149 : vector<2x32xf32>
    %188 = arith.mulf %182, %186 : vector<2x32xf32>
    %189 = arith.addf %187, %188 : vector<2x32xf32>
    %190 = math.tanh %189 : vector<2x32xf32>
    %191 = arith.mulf %184, %190 : vector<2x32xf32>
    %cst_45 = arith.constant dense<0.000000e+00> : vector<2x128xf32>
    %192 = tpu.matmul %191, %1, %cst_45 {dimension_numbers = #tpu.dot_dimension_numbers<[1], [0], [0], [1], [0, 0, 1, 1], [], []>} : vector<2x32xf32>, vector<32x128xf32>, vector<2x128xf32> -> vector<2x128xf32>
    %193 = arith.addf %192, %173 : vector<2x128xf32>
    %194 = vector.broadcast %5 : vector<1x128xf32> to vector<2x128xf32>
    %195 = arith.addf %193, %194 : vector<2x128xf32>
    %196 = vector.extract_strided_slice %195 {offsets = [0, 0], sizes = [2, 96], strides = [1, 1]} : vector<2x128xf32> to vector<2x96xf32>
    %197 = arith.negf %196 : vector<2x96xf32>
    %198 = math.exp %197 : vector<2x96xf32>
    %cst_46 = arith.constant 1.000000e+00 : f32
    %199 = vector.broadcast %cst_46 : f32 to vector<2x96xf32>
    %200 = arith.addf %199, %198 : vector<2x96xf32>
    %201 = arith.divf %199, %200 : vector<2x96xf32>
    %202 = vector.extract_strided_slice %201 {offsets = [0, 0], sizes = [2, 32], strides = [1, 1]} : vector<2x96xf32> to vector<2x32xf32>
    %203 = vector.extract_strided_slice %201 {offsets = [0, 32], sizes = [2, 32], strides = [1, 1]} : vector<2x96xf32> to vector<2x32xf32>
    %204 = vector.extract_strided_slice %201 {offsets = [0, 64], sizes = [2, 32], strides = [1, 1]} : vector<2x96xf32> to vector<2x32xf32>
    %205 = vector.extract_strided_slice %195 {offsets = [0, 96], sizes = [2, 32], strides = [1, 1]} : vector<2x128xf32> to vector<2x32xf32>
    %206 = math.tanh %205 : vector<2x32xf32>
    %207 = arith.mulf %203, %169 : vector<2x32xf32>
    %208 = arith.mulf %202, %206 : vector<2x32xf32>
    %209 = arith.addf %207, %208 : vector<2x32xf32>
    %210 = math.tanh %209 : vector<2x32xf32>
    %211 = arith.mulf %204, %210 : vector<2x32xf32>
    %cst_47 = arith.constant dense<0.000000e+00> : vector<2x128xf32>
    %212 = tpu.matmul %191, %2, %cst_47 {dimension_numbers = #tpu.dot_dimension_numbers<[1], [0], [0], [1], [0, 0, 1, 1], [], []>} : vector<2x32xf32>, vector<32x128xf32>, vector<2x128xf32> -> vector<2x128xf32>
    %cst_48 = arith.constant dense<0.000000e+00> : vector<2x128xf32>
    %213 = tpu.matmul %211, %3, %cst_48 {dimension_numbers = #tpu.dot_dimension_numbers<[1], [0], [0], [1], [0, 0, 1, 1], [], []>} : vector<2x32xf32>, vector<32x128xf32>, vector<2x128xf32> -> vector<2x128xf32>
    %c10 = arith.constant 10 : index
    %c0_49 = arith.constant 0 : index
    %214 = vector.load %arg10[%c10, %c0_49] : memref<16x128xf32, #tpu.memory_space<vmem>>, vector<2x128xf32>
    %215 = arith.addf %214, %212 : vector<2x128xf32>
    %216 = vector.extract_strided_slice %215 {offsets = [0, 0], sizes = [2, 96], strides = [1, 1]} : vector<2x128xf32> to vector<2x96xf32>
    %217 = arith.negf %216 : vector<2x96xf32>
    %218 = math.exp %217 : vector<2x96xf32>
    %cst_50 = arith.constant 1.000000e+00 : f32
    %219 = vector.broadcast %cst_50 : f32 to vector<2x96xf32>
    %220 = arith.addf %219, %218 : vector<2x96xf32>
    %221 = arith.divf %219, %220 : vector<2x96xf32>
    %222 = vector.extract_strided_slice %221 {offsets = [0, 0], sizes = [2, 32], strides = [1, 1]} : vector<2x96xf32> to vector<2x32xf32>
    %223 = vector.extract_strided_slice %221 {offsets = [0, 32], sizes = [2, 32], strides = [1, 1]} : vector<2x96xf32> to vector<2x32xf32>
    %224 = vector.extract_strided_slice %221 {offsets = [0, 64], sizes = [2, 32], strides = [1, 1]} : vector<2x96xf32> to vector<2x32xf32>
    %225 = vector.extract_strided_slice %215 {offsets = [0, 96], sizes = [2, 32], strides = [1, 1]} : vector<2x128xf32> to vector<2x32xf32>
    %226 = math.tanh %225 : vector<2x32xf32>
    %227 = arith.mulf %223, %189 : vector<2x32xf32>
    %228 = arith.mulf %222, %226 : vector<2x32xf32>
    %229 = arith.addf %227, %228 : vector<2x32xf32>
    %230 = math.tanh %229 : vector<2x32xf32>
    %231 = arith.mulf %224, %230 : vector<2x32xf32>
    %cst_51 = arith.constant dense<0.000000e+00> : vector<2x128xf32>
    %232 = tpu.matmul %231, %1, %cst_51 {dimension_numbers = #tpu.dot_dimension_numbers<[1], [0], [0], [1], [0, 0, 1, 1], [], []>} : vector<2x32xf32>, vector<32x128xf32>, vector<2x128xf32> -> vector<2x128xf32>
    %233 = arith.addf %232, %213 : vector<2x128xf32>
    %234 = vector.broadcast %5 : vector<1x128xf32> to vector<2x128xf32>
    %235 = arith.addf %233, %234 : vector<2x128xf32>
    %236 = vector.extract_strided_slice %235 {offsets = [0, 0], sizes = [2, 96], strides = [1, 1]} : vector<2x128xf32> to vector<2x96xf32>
    %237 = arith.negf %236 : vector<2x96xf32>
    %238 = math.exp %237 : vector<2x96xf32>
    %cst_52 = arith.constant 1.000000e+00 : f32
    %239 = vector.broadcast %cst_52 : f32 to vector<2x96xf32>
    %240 = arith.addf %239, %238 : vector<2x96xf32>
    %241 = arith.divf %239, %240 : vector<2x96xf32>
    %242 = vector.extract_strided_slice %241 {offsets = [0, 0], sizes = [2, 32], strides = [1, 1]} : vector<2x96xf32> to vector<2x32xf32>
    %243 = vector.extract_strided_slice %241 {offsets = [0, 32], sizes = [2, 32], strides = [1, 1]} : vector<2x96xf32> to vector<2x32xf32>
    %244 = vector.extract_strided_slice %241 {offsets = [0, 64], sizes = [2, 32], strides = [1, 1]} : vector<2x96xf32> to vector<2x32xf32>
    %245 = vector.extract_strided_slice %235 {offsets = [0, 96], sizes = [2, 32], strides = [1, 1]} : vector<2x128xf32> to vector<2x32xf32>
    %246 = math.tanh %245 : vector<2x32xf32>
    %247 = arith.mulf %243, %209 : vector<2x32xf32>
    %248 = arith.mulf %242, %246 : vector<2x32xf32>
    %249 = arith.addf %247, %248 : vector<2x32xf32>
    %250 = math.tanh %249 : vector<2x32xf32>
    %251 = arith.mulf %244, %250 : vector<2x32xf32>
    %cst_53 = arith.constant dense<0.000000e+00> : vector<2x128xf32>
    %252 = tpu.matmul %231, %2, %cst_53 {dimension_numbers = #tpu.dot_dimension_numbers<[1], [0], [0], [1], [0, 0, 1, 1], [], []>} : vector<2x32xf32>, vector<32x128xf32>, vector<2x128xf32> -> vector<2x128xf32>
    %cst_54 = arith.constant dense<0.000000e+00> : vector<2x128xf32>
    %253 = tpu.matmul %251, %3, %cst_54 {dimension_numbers = #tpu.dot_dimension_numbers<[1], [0], [0], [1], [0, 0, 1, 1], [], []>} : vector<2x32xf32>, vector<32x128xf32>, vector<2x128xf32> -> vector<2x128xf32>
    %c12 = arith.constant 12 : index
    %c0_55 = arith.constant 0 : index
    %254 = vector.load %arg10[%c12, %c0_55] : memref<16x128xf32, #tpu.memory_space<vmem>>, vector<2x128xf32>
    %255 = arith.addf %254, %252 : vector<2x128xf32>
    %256 = vector.extract_strided_slice %255 {offsets = [0, 0], sizes = [2, 96], strides = [1, 1]} : vector<2x128xf32> to vector<2x96xf32>
    %257 = arith.negf %256 : vector<2x96xf32>
    %258 = math.exp %257 : vector<2x96xf32>
    %cst_56 = arith.constant 1.000000e+00 : f32
    %259 = vector.broadcast %cst_56 : f32 to vector<2x96xf32>
    %260 = arith.addf %259, %258 : vector<2x96xf32>
    %261 = arith.divf %259, %260 : vector<2x96xf32>
    %262 = vector.extract_strided_slice %261 {offsets = [0, 0], sizes = [2, 32], strides = [1, 1]} : vector<2x96xf32> to vector<2x32xf32>
    %263 = vector.extract_strided_slice %261 {offsets = [0, 32], sizes = [2, 32], strides = [1, 1]} : vector<2x96xf32> to vector<2x32xf32>
    %264 = vector.extract_strided_slice %261 {offsets = [0, 64], sizes = [2, 32], strides = [1, 1]} : vector<2x96xf32> to vector<2x32xf32>
    %265 = vector.extract_strided_slice %255 {offsets = [0, 96], sizes = [2, 32], strides = [1, 1]} : vector<2x128xf32> to vector<2x32xf32>
    %266 = math.tanh %265 : vector<2x32xf32>
    %267 = arith.mulf %263, %229 : vector<2x32xf32>
    %268 = arith.mulf %262, %266 : vector<2x32xf32>
    %269 = arith.addf %267, %268 : vector<2x32xf32>
    %270 = math.tanh %269 : vector<2x32xf32>
    %271 = arith.mulf %264, %270 : vector<2x32xf32>
    %cst_57 = arith.constant dense<0.000000e+00> : vector<2x128xf32>
    %272 = tpu.matmul %271, %1, %cst_57 {dimension_numbers = #tpu.dot_dimension_numbers<[1], [0], [0], [1], [0, 0, 1, 1], [], []>} : vector<2x32xf32>, vector<32x128xf32>, vector<2x128xf32> -> vector<2x128xf32>
    %273 = arith.addf %272, %253 : vector<2x128xf32>
    %274 = vector.broadcast %5 : vector<1x128xf32> to vector<2x128xf32>
    %275 = arith.addf %273, %274 : vector<2x128xf32>
    %276 = vector.extract_strided_slice %275 {offsets = [0, 0], sizes = [2, 96], strides = [1, 1]} : vector<2x128xf32> to vector<2x96xf32>
    %277 = arith.negf %276 : vector<2x96xf32>
    %278 = math.exp %277 : vector<2x96xf32>
    %cst_58 = arith.constant 1.000000e+00 : f32
    %279 = vector.broadcast %cst_58 : f32 to vector<2x96xf32>
    %280 = arith.addf %279, %278 : vector<2x96xf32>
    %281 = arith.divf %279, %280 : vector<2x96xf32>
    %282 = vector.extract_strided_slice %281 {offsets = [0, 0], sizes = [2, 32], strides = [1, 1]} : vector<2x96xf32> to vector<2x32xf32>
    %283 = vector.extract_strided_slice %281 {offsets = [0, 32], sizes = [2, 32], strides = [1, 1]} : vector<2x96xf32> to vector<2x32xf32>
    %284 = vector.extract_strided_slice %281 {offsets = [0, 64], sizes = [2, 32], strides = [1, 1]} : vector<2x96xf32> to vector<2x32xf32>
    %285 = vector.extract_strided_slice %275 {offsets = [0, 96], sizes = [2, 32], strides = [1, 1]} : vector<2x128xf32> to vector<2x32xf32>
    %286 = math.tanh %285 : vector<2x32xf32>
    %287 = arith.mulf %283, %249 : vector<2x32xf32>
    %288 = arith.mulf %282, %286 : vector<2x32xf32>
    %289 = arith.addf %287, %288 : vector<2x32xf32>
    %290 = math.tanh %289 : vector<2x32xf32>
    %291 = arith.mulf %284, %290 : vector<2x32xf32>
    %cst_59 = arith.constant dense<0.000000e+00> : vector<2x128xf32>
    %292 = tpu.matmul %271, %2, %cst_59 {dimension_numbers = #tpu.dot_dimension_numbers<[1], [0], [0], [1], [0, 0, 1, 1], [], []>} : vector<2x32xf32>, vector<32x128xf32>, vector<2x128xf32> -> vector<2x128xf32>
    %cst_60 = arith.constant dense<0.000000e+00> : vector<2x128xf32>
    %293 = tpu.matmul %291, %3, %cst_60 {dimension_numbers = #tpu.dot_dimension_numbers<[1], [0], [0], [1], [0, 0, 1, 1], [], []>} : vector<2x32xf32>, vector<32x128xf32>, vector<2x128xf32> -> vector<2x128xf32>
    %c14 = arith.constant 14 : index
    %c0_61 = arith.constant 0 : index
    %294 = vector.load %arg10[%c14, %c0_61] : memref<16x128xf32, #tpu.memory_space<vmem>>, vector<2x128xf32>
    %295 = arith.addf %294, %292 : vector<2x128xf32>
    %296 = vector.extract_strided_slice %295 {offsets = [0, 0], sizes = [2, 96], strides = [1, 1]} : vector<2x128xf32> to vector<2x96xf32>
    %297 = arith.negf %296 : vector<2x96xf32>
    %298 = math.exp %297 : vector<2x96xf32>
    %cst_62 = arith.constant 1.000000e+00 : f32
    %299 = vector.broadcast %cst_62 : f32 to vector<2x96xf32>
    %300 = arith.addf %299, %298 : vector<2x96xf32>
    %301 = arith.divf %299, %300 : vector<2x96xf32>
    %302 = vector.extract_strided_slice %301 {offsets = [0, 0], sizes = [2, 32], strides = [1, 1]} : vector<2x96xf32> to vector<2x32xf32>
    %303 = vector.extract_strided_slice %301 {offsets = [0, 32], sizes = [2, 32], strides = [1, 1]} : vector<2x96xf32> to vector<2x32xf32>
    %304 = vector.extract_strided_slice %301 {offsets = [0, 64], sizes = [2, 32], strides = [1, 1]} : vector<2x96xf32> to vector<2x32xf32>
    %305 = vector.extract_strided_slice %295 {offsets = [0, 96], sizes = [2, 32], strides = [1, 1]} : vector<2x128xf32> to vector<2x32xf32>
    %306 = math.tanh %305 : vector<2x32xf32>
    %307 = arith.mulf %303, %269 : vector<2x32xf32>
    %308 = arith.mulf %302, %306 : vector<2x32xf32>
    %309 = arith.addf %307, %308 : vector<2x32xf32>
    %310 = math.tanh %309 : vector<2x32xf32>
    %311 = arith.mulf %304, %310 : vector<2x32xf32>
    %cst_63 = arith.constant dense<0.000000e+00> : vector<2x128xf32>
    %312 = tpu.matmul %311, %1, %cst_63 {dimension_numbers = #tpu.dot_dimension_numbers<[1], [0], [0], [1], [0, 0, 1, 1], [], []>} : vector<2x32xf32>, vector<32x128xf32>, vector<2x128xf32> -> vector<2x128xf32>
    %313 = arith.addf %312, %293 : vector<2x128xf32>
    %314 = vector.broadcast %5 : vector<1x128xf32> to vector<2x128xf32>
    %315 = arith.addf %313, %314 : vector<2x128xf32>
    %316 = vector.extract_strided_slice %315 {offsets = [0, 0], sizes = [2, 96], strides = [1, 1]} : vector<2x128xf32> to vector<2x96xf32>
    %317 = arith.negf %316 : vector<2x96xf32>
    %318 = math.exp %317 : vector<2x96xf32>
    %cst_64 = arith.constant 1.000000e+00 : f32
    %319 = vector.broadcast %cst_64 : f32 to vector<2x96xf32>
    %320 = arith.addf %319, %318 : vector<2x96xf32>
    %321 = arith.divf %319, %320 : vector<2x96xf32>
    %322 = vector.extract_strided_slice %321 {offsets = [0, 0], sizes = [2, 32], strides = [1, 1]} : vector<2x96xf32> to vector<2x32xf32>
    %323 = vector.extract_strided_slice %321 {offsets = [0, 32], sizes = [2, 32], strides = [1, 1]} : vector<2x96xf32> to vector<2x32xf32>
    %324 = vector.extract_strided_slice %321 {offsets = [0, 64], sizes = [2, 32], strides = [1, 1]} : vector<2x96xf32> to vector<2x32xf32>
    %325 = vector.extract_strided_slice %315 {offsets = [0, 96], sizes = [2, 32], strides = [1, 1]} : vector<2x128xf32> to vector<2x32xf32>
    %326 = math.tanh %325 : vector<2x32xf32>
    %327 = arith.mulf %323, %289 : vector<2x32xf32>
    %328 = arith.mulf %322, %326 : vector<2x32xf32>
    %329 = arith.addf %327, %328 : vector<2x32xf32>
    %330 = math.tanh %329 : vector<2x32xf32>
    %331 = arith.mulf %324, %330 : vector<2x32xf32>
    %c0_65 = arith.constant 0 : index
    %c0_66 = arith.constant 0 : index
    %332 = vector.load %arg7[%c0_65, %c0_66] : memref<32x8xf32, #tpu.memory_space<vmem>>, vector<32x8xf32>
    %cst_67 = arith.constant dense<0.000000e+00> : vector<2x8xf32>
    %333 = tpu.matmul %331, %332, %cst_67 {dimension_numbers = #tpu.dot_dimension_numbers<[1], [0], [0], [1], [0, 0, 1, 1], [], []>} : vector<2x32xf32>, vector<32x8xf32>, vector<2x8xf32> -> vector<2x8xf32>
    %c0_68 = arith.constant 0 : index
    %c0_69 = arith.constant 0 : index
    %334 = vector.load %arg8[%c0_68, %c0_69] : memref<1x8xf32, #tpu.memory_space<vmem>>, vector<1x8xf32>
    %335 = vector.broadcast %334 : vector<1x8xf32> to vector<2x8xf32>
    %336 = arith.addf %333, %335 : vector<2x8xf32>
    %c0_70 = arith.constant 0 : index
    %c0_71 = arith.constant 0 : index
    %337 = vector.load %arg9[%c0_70, %c0_71] : memref<2x8xf32, #tpu.memory_space<vmem>>, vector<2x8xf32>
    tpu.vector_store %arg9[%c0_70, %c0_71], %336 {strides = array<i32>} : memref<2x8xf32, #tpu.memory_space<vmem>>, vector<2x8xf32>,
    return
  }
}

</mosaic_0001>

<llo_original>
// kernel: lstm_model_forward.1
$region0: #{lstm_model_forward.1}
  #allocation0 [shape = 'u32[]', space=smem, size = 0x4, offset = 0x4, fixed_abs, tag = 'smem constant byte address 0x4 - core index']
  #allocation1 [shape = 'u32[144,128]{1,0:T(1,128)}', space=vmem, size = 0x12000, scoped, tag = 'internal scratch']
  #allocation2 [shape = 'f32[16,128]{1,0:T(8,128)}', space=vmem, size = 0x2000, scoped, tag = 'scratch operand']
  %s0 = inlined_call_operand.vmem [shape: f32[16,16], index: 0, kind: input, shape index: {}]
  %s1 = inlined_call_operand.vmem [shape: f32[16,128], index: 1, kind: input, shape index: {}]
  %s2 = inlined_call_operand.vmem [shape: f32[32,128], index: 2, kind: input, shape index: {}]
  %s3 = inlined_call_operand.vmem [shape: f32[1,128], index: 3, kind: input, shape index: {}]
  %s4 = inlined_call_operand.vmem [shape: f32[32,128], index: 4, kind: input, shape index: {}]
  %s5 = inlined_call_operand.hbm [shape: f32[32,128], index: 5, kind: input, shape index: {}]
  %s6 = inlined_call_operand.hbm [shape: f32[1,128], index: 6, kind: input, shape index: {}]
  %s7 = inlined_call_operand.vmem [shape: f32[32,8], index: 7, kind: input, shape index: {}]
  %s8 = inlined_call_operand.hbm [shape: f32[1,8], index: 8, kind: input, shape index: {}]
  %s9 = inlined_call_operand.hbm [shape: f32[2,8], index: 9, kind: output, shape index: {}]
  %s10 = sld [smem:[#allocation0]]
  $region58: #{lstm_model_forward.1} parent=0
    _
  %s12 = ssub.s32 1, %s10
  %s13 = scalar_select 0, %s12, %s10
  $region1: #{lstm_model_forward.1} parent=0
    #allocation3 [shape = 'u8[16384]{0}', space=vmem, size = 0x4000, scoped, tag = 'input window, operand 5, single buffered']
    #allocation4 [shape = 's32[1]{0}', space=sflag, size = 0x4, scoped, tag = 'scoped memory for lstm_model_forward.1']
    #allocation5 [shape = 's32[1]{0}', space=sflag, size = 0x4, scoped, tag = 'scoped memory for lstm_model_forward.1']
    #allocation6 [shape = 'u8[512]{0}', space=vmem, size = 0x400, scoped, tag = 'input window, operand 6, single buffered']
    #allocation7 [shape = 's32[1]{0}', space=sflag, size = 0x4, scoped, tag = 'scoped memory for lstm_model_forward.1']
    #allocation8 [shape = 'u8[512]{0}', space=vmem, size = 0x400, scoped, tag = 'input window, operand 8, single buffered']
    #allocation9 [shape = 'u8[1024]{0}', space=vmem, size = 0x400, scoped, tag = 'output window, operand 0, single buffered']
    %14 = vsyncpa [#allocation4], 0
    %15 = vsyncpa [#allocation7], 0
    %16 = vsyncpa [#allocation5], 0
    // Predicated region
    $region2: #{lstm_model_forward.1} parent=1 // pred_check
      _
    $region3: #{lstm_model_forward.1} parent=1 // pred_check_branch
      %18 = sbr.rel (0) target = $region5
    $region4: #{lstm_model_forward.1} parent=1 // pred_region
      _
    $region5: #{lstm_model_forward.1} parent=1 // pred_fallthru
      _
    // Predicated region
    $region6: #{lstm_model_forward.1} parent=1 // pred_check
      _
    $region7: #{lstm_model_forward.1} parent=1 // pred_check_branch
      %20 = sbr.rel (0) target = $region9
    $region8: #{lstm_model_forward.1} parent=1 // pred_region
      _
    $region9: #{lstm_model_forward.1} parent=1 // pred_fallthru
      _
    // Predicated region
    $region10: #{lstm_model_forward.1} parent=1 // pred_check
      _
    $region11: #{lstm_model_forward.1} parent=1 // pred_check_branch
      %22 = sbr.rel (0) target = $region13
    $region12: #{lstm_model_forward.1} parent=1 // pred_region
      _
    $region13: #{lstm_model_forward.1} parent=1 // pred_fallthru
      _
    // Predicated region
    $region14: #{lstm_model_forward.1} parent=1 // pred_check
      _
    $region15: #{lstm_model_forward.1} parent=1 // pred_check_branch
      %24 = sbr.rel (0) target = $region17
    $region16: #{lstm_model_forward.1} parent=1 // pred_region
      _
    $region17: #{lstm_model_forward.1} parent=1 // pred_fallthru
      _
    // Predicated region
    $region18: #{lstm_model_forward.1} parent=1 // pred_check
      _
    $region19: #{lstm_model_forward.1} parent=1 // pred_check_branch
      %26 = sbr.rel (0) target = $region21
    $region20: #{lstm_model_forward.1} parent=1 // pred_region
      _
    $region21: #{lstm_model_forward.1} parent=1 // pred_fallthru
      _
    // Predicated region
    $region22: #{lstm_model_forward.1} parent=1 // pred_check
      _
    $region23: #{lstm_model_forward.1} parent=1 // pred_check_branch
      %28 = sbr.rel (0) target = $region25
    $region24: #{lstm_model_forward.1} parent=1 // pred_region
      %s30 = ssub.s32 512, 512
      %31 = vsyncadd [#allocation4], %s30
      %s32 = sshll.u32 [#allocation3], 4
      %s33 = int_to_ptr.vmem [resolvable:$true] %s32
      %38 = dma.hbm_to_vmem [thread:$0]  %s5, 512, %s33, [#allocation4], 128, 128, 8
    $region25: #{lstm_model_forward.1} parent=1 // pred_fallthru
      _
    // Predicated region
    $region26: #{lstm_model_forward.1} parent=1 // pred_check
      _
    $region27: #{lstm_model_forward.1} parent=1 // pred_check_branch
      %40 = sbr.rel (0) target = $region29
    $region28: #{lstm_model_forward.1} parent=1 // pred_region
      %s42 = ssub.s32 16, 16
      %43 = vsyncadd [#allocation7], %s42
      %s45 = sshll.u32 [#allocation6], 4
      %s46 = int_to_ptr.vmem [resolvable:$true] %s45
      %48 = dma.hbm_to_vmem [thread:$0]  %s6, 16, %s46, [#allocation7]
    $region29: #{lstm_model_forward.1} parent=1 // pred_fallthru
      _
    // Predicated region
    $region30: #{lstm_model_forward.1} parent=1 // pred_check
      _
    $region31: #{lstm_model_forward.1} parent=1 // pred_check_branch
      %50 = sbr.rel (0) target = $region33
    $region32: #{lstm_model_forward.1} parent=1 // pred_region
      _
    $region33: #{lstm_model_forward.1} parent=1 // pred_fallthru
      _
    // Predicated region
    $region34: #{lstm_model_forward.1} parent=1 // pred_check
      _
    $region35: #{lstm_model_forward.1} parent=1 // pred_check_branch
      %52 = sbr.rel (0) target = $region37
    $region36: #{lstm_model_forward.1} parent=1 // pred_region
      %s54 = ssub.s32 16, 16
      %55 = vsyncadd [#allocation7], %s54
      %s57 = sshll.u32 [#allocation8], 4
      %s58 = int_to_ptr.vmem [resolvable:$true] %s57
      %60 = dma.hbm_to_vmem [thread:$0]  %s8, 16, %s58, [#allocation7]
    $region37: #{lstm_model_forward.1} parent=1 // pred_fallthru
      _
    // Predicated region
    $region38: #{lstm_model_forward.1} parent=1 // pred_check
      _
    $region39: #{lstm_model_forward.1} parent=1 // pred_check_branch
      %62 = sbr.rel (0) target = $region41
    $region40: #{lstm_model_forward.1} parent=1 // pred_region
      %63 = dma.done [#allocation4], 512
    $region41: #{lstm_model_forward.1} parent=1 // pred_fallthru
      _
    // Predicated region
    $region42: #{lstm_model_forward.1} parent=1 // pred_check
      _
    $region43: #{lstm_model_forward.1} parent=1 // pred_check_branch
      %65 = sbr.rel (0) target = $region45
    $region44: #{lstm_model_forward.1} parent=1 // pred_region
      %66 = dma.done [#allocation7], 16
    $region45: #{lstm_model_forward.1} parent=1 // pred_fallthru
      _
    // Predicated region
    $region46: #{lstm_model_forward.1} parent=1 // pred_check
      _
    $region47: #{lstm_model_forward.1} parent=1 // pred_check_branch
      %68 = sbr.rel (0) target = $region49
    $region48: #{lstm_model_forward.1} parent=1 // pred_region
      %69 = dma.done [#allocation7], 16
    $region49: #{lstm_model_forward.1} parent=1 // pred_fallthru
      _
    %v70 = vld [vmem:[%s1] sm:$0xff]
    %v71 = vld [vmem:[%s1 + $0x8] sm:$0xff]
    %v72 = vld [vmem:[%s4] sm:$0xff]
    %v73 = vld [vmem:[%s4 + $0x8] sm:$0xff]
    %v74 = vld [vmem:[%s4 + $0x10] sm:$0xff]
    %v75 = vld [vmem:[%s4 + $0x18] sm:$0xff]
    %v76 = vld [vmem:[%s2] sm:$0xff]
    %v77 = vld [vmem:[%s2 + $0x8] sm:$0xff]
    %v78 = vld [vmem:[%s2 + $0x10] sm:$0xff]
    %v79 = vld [vmem:[%s2 + $0x18] sm:$0xff]
    %v80 = vld [vmem:[#allocation3] sm:$0xff]
    %v81 = vld [vmem:[#allocation3 + $0x8] sm:$0xff]
    %v82 = vld [vmem:[#allocation3 + $0x10] sm:$0xff]
    %v83 = vld [vmem:[#allocation3 + $0x18] sm:$0xff]
    %v84 = vld [vmem:[%s3] sm:$0x1]
    %v85 = vld [vmem:[#allocation6] sm:$0x1]
    %v86 = vld [vmem:[%s0] sm:$0xff]
    %v87 = vld [vmem:[%s0 + $0x8] sm:$0xff]
    %v89 = vlaneseq
    %v90 = vshrl.u32 %v89, 7
    %v91 = vsub.s32 0, %v90
    %v92 = vrot.slane %v84, %v91
    %vm94 = vcmask 130048
    %v96 = vsel %vm94, %v86, 0
    %v99 = vsel %vm94, %v87, 0
    %101 = vmatprep.subr.mxu0 0.0
    %102 = vmatpush1.msra.mxu0 0.0
    %103 = vmatprep.subr.mxu0 0.0
    %104 = vmatpush1.msra.mxu0 0.0
    %105 = vmatprep.subr.mxu0 0.0
    %106 = vmatpush1.msra.mxu0 0.0
    %107 = vmatprep.subr.mxu0 0.0
    %108 = vmatpush1.msra.mxu0 0.0
    %109 = vmatprep.subr.mxu0 0.0
    %110 = vmatpush1.msra.mxu0 0.0
    %111 = vmatprep.subr.mxu0 0.0
    %112 = vmatpush1.msra.mxu0 0.0
    %113 = vmatprep.subr.mxu0 0.0
    %114 = vmatpush1.msra.mxu0 0.0
    %115 = vmatprep.subr.mxu0 0.0
    %116 = vmatpush1.msra.mxu0 0.0
    %117 = vmatprep.subr.mxu0 0.0
    %118 = vmatpush1.msra.mxu0 0.0
    %119 = vmatprep.subr.mxu0 0.0
    %120 = vmatpush1.msra.mxu0 0.0
    %121 = vmatprep.subr.mxu0 0.0
    %122 = vmatpush1.msra.mxu0 0.0
    %123 = vmatprep.subr.mxu0 0.0
    %124 = vmatpush1.msra.mxu0 0.0
    %125 = vmatprep.subr.mxu0 0.0
    %126 = vmatpush1.msra.mxu0 0.0
    %127 = vmatprep.subr.mxu0 0.0
    %128 = vmatpush1.msra.mxu0 0.0
    %129 = vmatprep.subr.mxu0 0.0
    %130 = vmatpush1.msra.mxu0 %v71
    %131 = vmatprep.subr.mxu0 0.0
    %132 = vmatpush1.msra.mxu0 %v70
    %133 = vmatprep.subr.mxu0 0.0
    %134 = vmatpush2.msra.mxu0 0.0
    %135 = vmatprep.subr.mxu0 0.0
    %136 = vmatpush2.msra.mxu0 0.0
    %137 = vmatprep.subr.mxu0 0.0
    %138 = vmatpush2.msra.mxu0 0.0
    %139 = vmatprep.subr.mxu0 0.0
    %140 = vmatpush2.msra.mxu0 0.0
    %141 = vmatprep.subr.mxu0 0.0
    %142 = vmatpush2.msra.mxu0 0.0
    %143 = vmatprep.subr.mxu0 0.0
    %144 = vmatpush2.msra.mxu0 0.0
    %145 = vmatprep.subr.mxu0 0.0
    %146 = vmatpush2.msra.mxu0 0.0
    %147 = vmatprep.subr.mxu0 0.0
    %148 = vmatpush2.msra.mxu0 0.0
    %149 = vmatprep.subr.mxu0 0.0
    %150 = vmatpush2.msra.mxu0 0.0
    %151 = vmatprep.subr.mxu0 0.0
    %152 = vmatpush2.msra.mxu0 0.0
    %153 = vmatprep.subr.mxu0 0.0
    %154 = vmatpush2.msra.mxu0 0.0
    %155 = vmatprep.subr.mxu0 0.0
    %156 = vmatpush2.msra.mxu0 0.0
    %157 = vmatprep.subr.mxu0 0.0
    %158 = vmatpush2.msra.mxu0 0.0
    %159 = vmatprep.subr.mxu0 0.0
    %160 = vmatpush2.msra.mxu0 0.0
    %161 = vmatprep.subr.mxu0 0.0
    %162 = vmatpush2.msra.mxu0 0.0
    %163 = vmatprep.subr.mxu0 0.0
    %164 = vmatpush2.msra.mxu0 0.0
    %165 = vmatprep.mubr.f32.mxu0 0.0
    %166 = vmatmul.mubr.f32.gmra.mxu0 %v96
    %v167 = vpop.f32.mrf.mxu0
    %v168 = vadd.f32 %v92, %v167
    %v169 = vpop.f32.mrf.mxu0
    %170 = vmatprep.mubr.f32.mxu0 0.0
    %171 = vmatmul.mubr.f32.gmra.mxu0 %v99
    %v172 = vpop.f32.mrf.mxu0
    %v173 = vadd.f32 %v92, %v172
    %v174 = vpop.f32.mrf.mxu0
    %175 = vdwg.mxu0
    %176 = vst [vmem:[#allocation2] sm:$0xff] %v168
    %177 = vst [vmem:[#allocation2 + $0x8] sm:$0xff] %v173
    %vm178 = vcmask 261120
    %v180 = vsel %vm178, 0.0, 0
    %182 = vmatprep.subr.mxu0 0.0
    %183 = vmatpush1.msra.mxu0 0.0
    %184 = vmatprep.subr.mxu0 0.0
    %185 = vmatpush1.msra.mxu0 0.0
    %186 = vmatprep.subr.mxu0 0.0
    %187 = vmatpush1.msra.mxu0 0.0
    %188 = vmatprep.subr.mxu0 0.0
    %189 = vmatpush1.msra.mxu0 0.0
    %190 = vmatprep.subr.mxu0 0.0
    %191 = vmatpush1.msra.mxu0 0.0
    %192 = vmatprep.subr.mxu0 0.0
    %193 = vmatpush1.msra.mxu0 0.0
    %194 = vmatprep.subr.mxu0 0.0
    %195 = vmatpush1.msra.mxu0 0.0
    %196 = vmatprep.subr.mxu0 0.0
    %197 = vmatpush1.msra.mxu0 0.0
    %198 = vmatprep.subr.mxu0 0.0
    %199 = vmatpush1.msra.mxu0 0.0
    %200 = vmatprep.subr.mxu0 0.0
    %201 = vmatpush1.msra.mxu0 0.0
    %202 = vmatprep.subr.mxu0 0.0
    %203 = vmatpush1.msra.mxu0 0.0
    %204 = vmatprep.subr.mxu0 0.0
    %205 = vmatpush1.msra.mxu0 0.0
    %206 = vmatprep.subr.mxu0 0.0
    %207 = vmatpush1.msra.mxu0 %v79
    %208 = vmatprep.subr.mxu0 0.0
    %209 = vmatpush1.msra.mxu0 %v78
    %210 = vmatprep.subr.mxu0 0.0
    %211 = vmatpush1.msra.mxu0 %v77
    %212 = vmatprep.subr.mxu0 0.0
    %213 = vmatpush1.msra.mxu0 %v76
    %214 = vmatprep.subr.mxu0 0.0
    %215 = vmatpush2.msra.mxu0 0.0
    %216 = vmatprep.subr.mxu0 0.0
    %217 = vmatpush2.msra.mxu0 0.0
    %218 = vmatprep.subr.mxu0 0.0
    %219 = vmatpush2.msra.mxu0 0.0
    %220 = vmatprep.subr.mxu0 0.0
    %221 = vmatpush2.msra.mxu0 0.0
    %222 = vmatprep.subr.mxu0 0.0
    %223 = vmatpush2.msra.mxu0 0.0
    %224 = vmatprep.subr.mxu0 0.0
    %225 = vmatpush2.msra.mxu0 0.0
    %226 = vmatprep.subr.mxu0 0.0
    %227 = vmatpush2.msra.mxu0 0.0
    %228 = vmatprep.subr.mxu0 0.0
    %229 = vmatpush2.msra.mxu0 0.0
    %230 = vmatprep.subr.mxu0 0.0
    %231 = vmatpush2.msra.mxu0 0.0
    %232 = vmatprep.subr.mxu0 0.0
    %233 = vmatpush2.msra.mxu0 0.0
    %234 = vmatprep.subr.mxu0 0.0
    %235 = vmatpush2.msra.mxu0 0.0
    %236 = vmatprep.subr.mxu0 0.0
    %237 = vmatpush2.msra.mxu0 0.0
    %238 = vmatprep.subr.mxu0 0.0
    %239 = vmatpush2.msra.mxu0 0.0
    %240 = vmatprep.subr.mxu0 0.0
    %241 = vmatpush2.msra.mxu0 0.0
    %242 = vmatprep.subr.mxu0 0.0
    %243 = vmatpush2.msra.mxu0 0.0
    %244 = vmatprep.subr.mxu0 0.0
    %245 = vmatpush2.msra.mxu0 0.0
    %246 = vmatprep.mubr.f32.mxu0 0.0
    %247 = vmatmul.mubr.f32.gmra.mxu0 %v180
    %v248 = vpop.f32.mrf.mxu0
    %v249 = vadd.f32 0.0, %v248
    %v250 = vpop.f32.mrf.mxu0
    %251 = vdwg.mxu0
    %252 = vmatprep.subr.mxu0 0.0
    %253 = vmatpush1.msra.mxu0 0.0
    %254 = vmatprep.subr.mxu0 0.0
    %255 = vmatpush1.msra.mxu0 0.0
    %256 = vmatprep.subr.mxu0 0.0
    %257 = vmatpush1.msra.mxu0 0.0
    %258 = vmatprep.subr.mxu0 0.0
    %259 = vmatpush1.msra.mxu0 0.0
    %260 = vmatprep.subr.mxu0 0.0
    %261 = vmatpush1.msra.mxu0 0.0
    %262 = vmatprep.subr.mxu0 0.0
    %263 = vmatpush1.msra.mxu0 0.0
    %264 = vmatprep.subr.mxu0 0.0
    %265 = vmatpush1.msra.mxu0 0.0
    %266 = vmatprep.subr.mxu0 0.0
    %267 = vmatpush1.msra.mxu0 0.0
    %268 = vmatprep.subr.mxu0 0.0
    %269 = vmatpush1.msra.mxu0 0.0
    %270 = vmatprep.subr.mxu0 0.0
    %271 = vmatpush1.msra.mxu0 0.0
    %272 = vmatprep.subr.mxu0 0.0
    %273 = vmatpush1.msra.mxu0 0.0
    %274 = vmatprep.subr.mxu0 0.0
    %275 = vmatpush1.msra.mxu0 0.0
    %276 = vmatprep.subr.mxu0 0.0
    %277 = vmatpush1.msra.mxu0 %v83
    %278 = vmatprep.subr.mxu0 0.0
    %279 = vmatpush1.msra.mxu0 %v82
    %280 = vmatprep.subr.mxu0 0.0
    %281 = vmatpush1.msra.mxu0 %v81
    %282 = vmatprep.subr.mxu0 0.0
    %283 = vmatpush1.msra.mxu0 %v80
    %284 = vmatprep.subr.mxu0 0.0
    %285 = vmatpush2.msra.mxu0 0.0
    %286 = vmatprep.subr.mxu0 0.0
    %287 = vmatpush2.msra.mxu0 0.0
    %288 = vmatprep.subr.mxu0 0.0
    %289 = vmatpush2.msra.mxu0 0.0
    %290 = vmatprep.subr.mxu0 0.0
    %291 = vmatpush2.msra.mxu0 0.0
    %292 = vmatprep.subr.mxu0 0.0
    %293 = vmatpush2.msra.mxu0 0.0
    %294 = vmatprep.subr.mxu0 0.0
    %295 = vmatpush2.msra.mxu0 0.0
    %296 = vmatprep.subr.mxu0 0.0
    %297 = vmatpush2.msra.mxu0 0.0
    %298 = vmatprep.subr.mxu0 0.0
    %299 = vmatpush2.msra.mxu0 0.0
    %300 = vmatprep.subr.mxu0 0.0
    %301 = vmatpush2.msra.mxu0 0.0
    %302 = vmatprep.subr.mxu0 0.0
    %303 = vmatpush2.msra.mxu0 0.0
    %304 = vmatprep.subr.mxu0 0.0
    %305 = vmatpush2.msra.mxu0 0.0
    %306 = vmatprep.subr.mxu0 0.0
    %307 = vmatpush2.msra.mxu0 0.0
    %308 = vmatprep.subr.mxu0 0.0
    %309 = vmatpush2.msra.mxu0 0.0
    %310 = vmatprep.subr.mxu0 0.0
    %311 = vmatpush2.msra.mxu0 0.0
    %312 = vmatprep.subr.mxu0 0.0
    %313 = vmatpush2.msra.mxu0 0.0
    %314 = vmatprep.subr.mxu0 0.0
    %315 = vmatpush2.msra.mxu0 0.0
    %316 = vmatprep.mubr.f32.mxu0 0.0
    %317 = vmatmul.mubr.f32.gmra.mxu0 %v180
    %v318 = vpop.f32.mrf.mxu0
    %v319 = vadd.f32 0.0, %v318
    %v320 = vpop.f32.mrf.mxu0
    %321 = vdwg.mxu0
    %v322 = vld [vmem:[#allocation2] sm:$0x3]
    %v323 = vadd.f32 %v322, %v249
    %v324 = vxor.u32 %v323, 2147483648
    %v325 = vmul.f32 %v324, 1.442695
    %v326 = vpow.pop %v325
    %v327 = vadd.f32 %v326, 1.0
    %v328 = vrcp.pop %v327
    %v329 = vmul.f32 1.0, %v328
    %v330 = vtanh.pop %v323
    %v331 = vmul.f32 %v329, 0.0
    %333 = vrot.lane.b32.xlu0 %v330, 32
    %v334 = vpop.permute.xlu0 %333
    %v336 = vmul.f32 %v329, %v334
    %338 = vrot.lane.b32.xlu0 %v336, 32
    %v339 = vpop.permute.xlu0 %338
    %v341 = vadd.f32 %v331, %v339
    %v342 = vtanh.pop %v341
    %344 = vrot.lane.b32.xlu0 %v342, 32
    %v345 = vpop.permute.xlu0 %344
    %v347 = vmul.f32 %v329, %v345
    %349 = vrot.lane.b32.xlu0 %v347, 64
    %v350 = vpop.permute.xlu0 %349
    %v351 = vsel %vm178, %v350, 0
    %353 = vmatprep.subr.mxu0 0.0
    %354 = vmatpush1.msra.mxu0 0.0
    %355 = vmatprep.subr.mxu0 0.0
    %356 = vmatpush1.msra.mxu0 0.0
    %357 = vmatprep.subr.mxu0 0.0
    %358 = vmatpush1.msra.mxu0 0.0
    %359 = vmatprep.subr.mxu0 0.0
    %360 = vmatpush1.msra.mxu0 0.0
    %361 = vmatprep.subr.mxu0 0.0
    %362 = vmatpush1.msra.mxu0 0.0
    %363 = vmatprep.subr.mxu0 0.0
    %364 = vmatpush1.msra.mxu0 0.0
    %365 = vmatprep.subr.mxu0 0.0
    %366 = vmatpush1.msra.mxu0 0.0
    %367 = vmatprep.subr.mxu0 0.0
    %368 = vmatpush1.msra.mxu0 0.0
    %369 = vmatprep.subr.mxu0 0.0
    %370 = vmatpush1.msra.mxu0 0.0
    %371 = vmatprep.subr.mxu0 0.0
    %372 = vmatpush1.msra.mxu0 0.0
    %373 = vmatprep.subr.mxu0 0.0
    %374 = vmatpush1.msra.mxu0 0.0
    %375 = vmatprep.subr.mxu0 0.0
    %376 = vmatpush1.msra.mxu0 0.0
    %377 = vmatprep.subr.mxu0 0.0
    %378 = vmatpush1.msra.mxu0 %v75
    %379 = vmatprep.subr.mxu0 0.0
    %380 = vmatpush1.msra.mxu0 %v74
    %381 = vmatprep.subr.mxu0 0.0
    %382 = vmatpush1.msra.mxu0 %v73
    %383 = vmatprep.subr.mxu0 0.0
    %384 = vmatpush1.msra.mxu0 %v72
    %385 = vmatprep.subr.mxu0 0.0
    %386 = vmatpush2.msra.mxu0 0.0
    %387 = vmatprep.subr.mxu0 0.0
    %388 = vmatpush2.msra.mxu0 0.0
    %389 = vmatprep.subr.mxu0 0.0
    %390 = vmatpush2.msra.mxu0 0.0
    %391 = vmatprep.subr.mxu0 0.0
    %392 = vmatpush2.msra.mxu0 0.0
    %393 = vmatprep.subr.mxu0 0.0
    %394 = vmatpush2.msra.mxu0 0.0
    %395 = vmatprep.subr.mxu0 0.0
    %396 = vmatpush2.msra.mxu0 0.0
    %397 = vmatprep.subr.mxu0 0.0
    %398 = vmatpush2.msra.mxu0 0.0
    %399 = vmatprep.subr.mxu0 0.0
    %400 = vmatpush2.msra.mxu0 0.0
    %401 = vmatprep.subr.mxu0 0.0
    %402 = vmatpush2.msra.mxu0 0.0
    %403 = vmatprep.subr.mxu0 0.0
    %404 = vmatpush2.msra.mxu0 0.0
    %405 = vmatprep.subr.mxu0 0.0
    %406 = vmatpush2.msra.mxu0 0.0
    %407 = vmatprep.subr.mxu0 0.0
    %408 = vmatpush2.msra.mxu0 0.0
    %409 = vmatprep.subr.mxu0 0.0
    %410 = vmatpush2.msra.mxu0 0.0
    %411 = vmatprep.subr.mxu0 0.0
    %412 = vmatpush2.msra.mxu0 0.0
    %413 = vmatprep.subr.mxu0 0.0
    %414 = vmatpush2.msra.mxu0 0.0
    %415 = vmatprep.subr.mxu0 0.0
    %416 = vmatpush2.msra.mxu0 0.0
    %417 = vmatprep.mubr.f32.mxu0 0.0
    %418 = vmatmul.mubr.f32.gmra.mxu0 %v351
    %v419 = vpop.f32.mrf.mxu0
    %v420 = vadd.f32 %v319, %v419
    %v421 = vpop.f32.mrf.mxu0
    %422 = vdwg.mxu0
    %v424 = vlaneseq
    %v425 = vshrl.u32 %v424, 7
    %v426 = vsub.s32 0, %v425
    %v427 = vrot.slane %v85, %v426
    %v429 = vadd.f32 %v420, %v427
    %v430 = vxor.u32 %v429, 2147483648
    %v431 = vmul.f32 %v430, 1.442695
    %v432 = vpow.pop %v431
    %v433 = vadd.f32 %v432, 1.0
    %v434 = vrcp.pop %v433
    %v435 = vmul.f32 1.0, %v434
    %v436 = vtanh.pop %v429
    %v437 = vmul.f32 %v435, 0.0
    %439 = vrot.lane.b32.xlu0 %v436, 32
    %v440 = vpop.permute.xlu0 %439
    %v442 = vmul.f32 %v435, %v440
    %444 = vrot.lane.b32.xlu0 %v442, 32
    %v445 = vpop.permute.xlu0 %444
    %v447 = vadd.f32 %v437, %v445
    %v448 = vtanh.pop %v447
    %450 = vrot.lane.b32.xlu0 %v448, 32
    %v451 = vpop.permute.xlu0 %450
    %v453 = vmul.f32 %v435, %v451
    %454 = vmatprep.subr.mxu0 0.0
    %455 = vmatpush1.msra.mxu0 0.0
    %456 = vmatprep.subr.mxu0 0.0
    %457 = vmatpush1.msra.mxu0 0.0
    %458 = vmatprep.subr.mxu0 0.0
    %459 = vmatpush1.msra.mxu0 0.0
    %460 = vmatprep.subr.mxu0 0.0
    %461 = vmatpush1.msra.mxu0 0.0
    %462 = vmatprep.subr.mxu0 0.0
    %463 = vmatpush1.msra.mxu0 0.0
    %464 = vmatprep.subr.mxu0 0.0
    %465 = vmatpush1.msra.mxu0 0.0
    %466 = vmatprep.subr.mxu0 0.0
    %467 = vmatpush1.msra.mxu0 0.0
    %468 = vmatprep.subr.mxu0 0.0
    %469 = vmatpush1.msra.mxu0 0.0
    %470 = vmatprep.subr.mxu0 0.0
    %471 = vmatpush1.msra.mxu0 0.0
    %472 = vmatprep.subr.mxu0 0.0
    %473 = vmatpush1.msra.mxu0 0.0
    %474 = vmatprep.subr.mxu0 0.0
    %475 = vmatpush1.msra.mxu0 0.0
    %476 = vmatprep.subr.mxu0 0.0
    %477 = vmatpush1.msra.mxu0 0.0
    %478 = vmatprep.subr.mxu0 0.0
    %479 = vmatpush1.msra.mxu0 %v79
    %480 = vmatprep.subr.mxu0 0.0
    %481 = vmatpush1.msra.mxu0 %v78
    %482 = vmatprep.subr.mxu0 0.0
    %483 = vmatpush1.msra.mxu0 %v77
    %484 = vmatprep.subr.mxu0 0.0
    %485 = vmatpush1.msra.mxu0 %v76
    %486 = vmatprep.subr.mxu0 0.0
    %487 = vmatpush2.msra.mxu0 0.0
    %488 = vmatprep.subr.mxu0 0.0
    %489 = vmatpush2.msra.mxu0 0.0
    %490 = vmatprep.subr.mxu0 0.0
    %491 = vmatpush2.msra.mxu0 0.0
    %492 = vmatprep.subr.mxu0 0.0
    %493 = vmatpush2.msra.mxu0 0.0
    %494 = vmatprep.subr.mxu0 0.0
    %495 = vmatpush2.msra.mxu0 0.0
    %496 = vmatprep.subr.mxu0 0.0
    %497 = vmatpush2.msra.mxu0 0.0
    %498 = vmatprep.subr.mxu0 0.0
    %499 = vmatpush2.msra.mxu0 0.0
    %500 = vmatprep.subr.mxu0 0.0
    %501 = vmatpush2.msra.mxu0 0.0
    %502 = vmatprep.subr.mxu0 0.0
    %503 = vmatpush2.msra.mxu0 0.0
    %504 = vmatprep.subr.mxu0 0.0
    %505 = vmatpush2.msra.mxu0 0.0
    %506 = vmatprep.subr.mxu0 0.0
    %507 = vmatpush2.msra.mxu0 0.0
    %508 = vmatprep.subr.mxu0 0.0
    %509 = vmatpush2.msra.mxu0 0.0
    %510 = vmatprep.subr.mxu0 0.0
    %511 = vmatpush2.msra.mxu0 0.0
    %512 = vmatprep.subr.mxu0 0.0
    %513 = vmatpush2.msra.mxu0 0.0
    %514 = vmatprep.subr.mxu0 0.0
    %515 = vmatpush2.msra.mxu0 0.0
    %516 = vmatprep.subr.mxu0 0.0
    %517 = vmatpush2.msra.mxu0 0.0
    %518 = vmatprep.mubr.f32.mxu0 0.0
    %519 = vmatmul.mubr.f32.gmra.mxu0 %v351
    %v520 = vpop.f32.mrf.mxu0
    %v521 = vadd.f32 0.0, %v520
    %v522 = vpop.f32.mrf.mxu0
    %523 = vdwg.mxu0
    %525 = vrot.lane.b32.xlu0 %v453, 64
    %v526 = vpop.permute.xlu0 %525
    %v527 = vsel %vm178, %v526, 0
    %529 = vmatprep.subr.mxu0 0.0
    %530 = vmatpush1.msra.mxu0 0.0
    %531 = vmatprep.subr.mxu0 0.0
    %532 = vmatpush1.msra.mxu0 0.0
    %533 = vmatprep.subr.mxu0 0.0
    %534 = vmatpush1.msra.mxu0 0.0
    %535 = vmatprep.subr.mxu0 0.0
    %536 = vmatpush1.msra.mxu0 0.0
    %537 = vmatprep.subr.mxu0 0.0
    %538 = vmatpush1.msra.mxu0 0.0
    %539 = vmatprep.subr.mxu0 0.0
    %540 = vmatpush1.msra.mxu0 0.0
    %541 = vmatprep.subr.mxu0 0.0
    %542 = vmatpush1.msra.mxu0 0.0
    %543 = vmatprep.subr.mxu0 0.0
    %544 = vmatpush1.msra.mxu0 0.0
    %545 = vmatprep.subr.mxu0 0.0
    %546 = vmatpush1.msra.mxu0 0.0
    %547 = vmatprep.subr.mxu0 0.0
    %548 = vmatpush1.msra.mxu0 0.0
    %549 = vmatprep.subr.mxu0 0.0
    %550 = vmatpush1.msra.mxu0 0.0
    %551 = vmatprep.subr.mxu0 0.0
    %552 = vmatpush1.msra.mxu0 0.0
    %553 = vmatprep.subr.mxu0 0.0
    %554 = vmatpush1.msra.mxu0 %v83
    %555 = vmatprep.subr.mxu0 0.0
    %556 = vmatpush1.msra.mxu0 %v82
    %557 = vmatprep.subr.mxu0 0.0
    %558 = vmatpush1.msra.mxu0 %v81
    %559 = vmatprep.subr.mxu0 0.0
    %560 = vmatpush1.msra.mxu0 %v80
    %561 = vmatprep.subr.mxu0 0.0
    %562 = vmatpush2.msra.mxu0 0.0
    %563 = vmatprep.subr.mxu0 0.0
    %564 = vmatpush2.msra.mxu0 0.0
    %565 = vmatprep.subr.mxu0 0.0
    %566 = vmatpush2.msra.mxu0 0.0
    %567 = vmatprep.subr.mxu0 0.0
    %568 = vmatpush2.msra.mxu0 0.0
    %569 = vmatprep.subr.mxu0 0.0
    %570 = vmatpush2.msra.mxu0 0.0
    %571 = vmatprep.subr.mxu0 0.0
    %572 = vmatpush2.msra.mxu0 0.0
    %573 = vmatprep.subr.mxu0 0.0
    %574 = vmatpush2.msra.mxu0 0.0
    %575 = vmatprep.subr.mxu0 0.0
    %576 = vmatpush2.msra.mxu0 0.0
    %577 = vmatprep.subr.mxu0 0.0
    %578 = vmatpush2.msra.mxu0 0.0
    %579 = vmatprep.subr.mxu0 0.0
    %580 = vmatpush2.msra.mxu0 0.0
    %581 = vmatprep.subr.mxu0 0.0
    %582 = vmatpush2.msra.mxu0 0.0
    %583 = vmatprep.subr.mxu0 0.0
    %584 = vmatpush2.msra.mxu0 0.0
    %585 = vmatprep.subr.mxu0 0.0
    %586 = vmatpush2.msra.mxu0 0.0
    %587 = vmatprep.subr.mxu0 0.0
    %588 = vmatpush2.msra.mxu0 0.0
    %589 = vmatprep.subr.mxu0 0.0
    %590 = vmatpush2.msra.mxu0 0.0
    %591 = vmatprep.subr.mxu0 0.0
    %592 = vmatpush2.msra.mxu0 0.0
    %593 = vmatprep.mubr.f32.mxu0 0.0
    %594 = vmatmul.mubr.f32.gmra.mxu0 %v527
    %v595 = vpop.f32.mrf.mxu0
    %v596 = vadd.f32 0.0, %v595
    %v597 = vpop.f32.mrf.mxu0
    %598 = vdwg.mxu0
    %v599 = vld [vmem:[#allocation2 + $0x2] sm:$0x3]
    %v600 = vadd.f32 %v599, %v521
    %v601 = vxor.u32 %v600, 2147483648
    %v602 = vmul.f32 %v601, 1.442695
    %v603 = vpow.pop %v602
    %v604 = vadd.f32 %v603, 1.0
    %v605 = vrcp.pop %v604
    %v606 = vmul.f32 1.0, %v605
    %v607 = vtanh.pop %v600
    %v608 = vmul.f32 %v606, %v341
    %610 = vrot.lane.b32.xlu0 %v607, 32
    %v611 = vpop.permute.xlu0 %610
    %v613 = vmul.f32 %v606, %v611
    %615 = vrot.lane.b32.xlu0 %v613, 32
    %v616 = vpop.permute.xlu0 %615
    %v618 = vadd.f32 %v608, %v616
    %v619 = vtanh.pop %v618
    %621 = vrot.lane.b32.xlu0 %v619, 32
    %v622 = vpop.permute.xlu0 %621
    %v624 = vmul.f32 %v606, %v622
    %626 = vrot.lane.b32.xlu0 %v624, 64
    %v627 = vpop.permute.xlu0 %626
    %v628 = vsel %vm178, %v627, 0
    %630 = vmatprep.subr.mxu0 0.0
    %631 = vmatpush1.msra.mxu0 0.0
    %632 = vmatprep.subr.mxu0 0.0
    %633 = vmatpush1.msra.mxu0 0.0
    %634 = vmatprep.subr.mxu0 0.0
    %635 = vmatpush1.msra.mxu0 0.0
    %636 = vmatprep.subr.mxu0 0.0
    %637 = vmatpush1.msra.mxu0 0.0
    %638 = vmatprep.subr.mxu0 0.0
    %639 = vmatpush1.msra.mxu0 0.0
    %640 = vmatprep.subr.mxu0 0.0
    %641 = vmatpush1.msra.mxu0 0.0
    %642 = vmatprep.subr.mxu0 0.0
    %643 = vmatpush1.msra.mxu0 0.0
    %644 = vmatprep.subr.mxu0 0.0
    %645 = vmatpush1.msra.mxu0 0.0
    %646 = vmatprep.subr.mxu0 0.0
    %647 = vmatpush1.msra.mxu0 0.0
    %648 = vmatprep.subr.mxu0 0.0
    %649 = vmatpush1.msra.mxu0 0.0
    %650 = vmatprep.subr.mxu0 0.0
    %651 = vmatpush1.msra.mxu0 0.0
    %652 = vmatprep.subr.mxu0 0.0
    %653 = vmatpush1.msra.mxu0 0.0
    %654 = vmatprep.subr.mxu0 0.0
    %655 = vmatpush1.msra.mxu0 %v75
    %656 = vmatprep.subr.mxu0 0.0
    %657 = vmatpush1.msra.mxu0 %v74
    %658 = vmatprep.subr.mxu0 0.0
    %659 = vmatpush1.msra.mxu0 %v73
    %660 = vmatprep.subr.mxu0 0.0
    %661 = vmatpush1.msra.mxu0 %v72
    %662 = vmatprep.subr.mxu0 0.0
    %663 = vmatpush2.msra.mxu0 0.0
    %664 = vmatprep.subr.mxu0 0.0
    %665 = vmatpush2.msra.mxu0 0.0
    %666 = vmatprep.subr.mxu0 0.0
    %667 = vmatpush2.msra.mxu0 0.0
    %668 = vmatprep.subr.mxu0 0.0
    %669 = vmatpush2.msra.mxu0 0.0
    %670 = vmatprep.subr.mxu0 0.0
    %671 = vmatpush2.msra.mxu0 0.0
    %672 = vmatprep.subr.mxu0 0.0
    %673 = vmatpush2.msra.mxu0 0.0
    %674 = vmatprep.subr.mxu0 0.0
    %675 = vmatpush2.msra.mxu0 0.0
    %676 = vmatprep.subr.mxu0 0.0
    %677 = vmatpush2.msra.mxu0 0.0
    %678 = vmatprep.subr.mxu0 0.0
    %679 = vmatpush2.msra.mxu0 0.0
    %680 = vmatprep.subr.mxu0 0.0
    %681 = vmatpush2.msra.mxu0 0.0
    %682 = vmatprep.subr.mxu0 0.0
    %683 = vmatpush2.msra.mxu0 0.0
    %684 = vmatprep.subr.mxu0 0.0
    %685 = vmatpush2.msra.mxu0 0.0
    %686 = vmatprep.subr.mxu0 0.0
    %687 = vmatpush2.msra.mxu0 0.0
    %688 = vmatprep.subr.mxu0 0.0
    %689 = vmatpush2.msra.mxu0 0.0
    %690 = vmatprep.subr.mxu0 0.0
    %691 = vmatpush2.msra.mxu0 0.0
    %692 = vmatprep.subr.mxu0 0.0
    %693 = vmatpush2.msra.mxu0 0.0
    %694 = vmatprep.mubr.f32.mxu0 0.0
    %695 = vmatmul.mubr.f32.gmra.mxu0 %v628
    %v696 = vpop.f32.mrf.mxu0
    %v697 = vadd.f32 %v596, %v696
    %v698 = vpop.f32.mrf.mxu0
    %699 = vdwg.mxu0
    %v700 = vadd.f32 %v697, %v427
    %v701 = vxor.u32 %v700, 2147483648
    %v702 = vmul.f32 %v701, 1.442695
    %v703 = vpow.pop %v702
    %v704 = vadd.f32 %v703, 1.0
    %v705 = vrcp.pop %v704
    %v706 = vmul.f32 1.0, %v705
    %v707 = vtanh.pop %v700
    %v708 = vmul.f32 %v706, %v447
    %710 = vrot.lane.b32.xlu0 %v707, 32
    %v711 = vpop.permute.xlu0 %710
    %v713 = vmul.f32 %v706, %v711
    %715 = vrot.lane.b32.xlu0 %v713, 32
    %v716 = vpop.permute.xlu0 %715
    %v718 = vadd.f32 %v708, %v716
    %v719 = vtanh.pop %v718
    %721 = vrot.lane.b32.xlu0 %v719, 32
    %v722 = vpop.permute.xlu0 %721
    %v724 = vmul.f32 %v706, %v722
    %725 = vmatprep.subr.mxu0 0.0
    %726 = vmatpush1.msra.mxu0 0.0
    %727 = vmatprep.subr.mxu0 0.0
    %728 = vmatpush1.msra.mxu0 0.0
    %729 = vmatprep.subr.mxu0 0.0
    %730 = vmatpush1.msra.mxu0 0.0
    %731 = vmatprep.subr.mxu0 0.0
    %732 = vmatpush1.msra.mxu0 0.0
    %733 = vmatprep.subr.mxu0 0.0
    %734 = vmatpush1.msra.mxu0 0.0
    %735 = vmatprep.subr.mxu0 0.0
    %736 = vmatpush1.msra.mxu0 0.0
    %737 = vmatprep.subr.mxu0 0.0
    %738 = vmatpush1.msra.mxu0 0.0
    %739 = vmatprep.subr.mxu0 0.0
    %740 = vmatpush1.msra.mxu0 0.0
    %741 = vmatprep.subr.mxu0 0.0
    %742 = vmatpush1.msra.mxu0 0.0
    %743 = vmatprep.subr.mxu0 0.0
    %744 = vmatpush1.msra.mxu0 0.0
    %745 = vmatprep.subr.mxu0 0.0
    %746 = vmatpush1.msra.mxu0 0.0
    %747 = vmatprep.subr.mxu0 0.0
    %748 = vmatpush1.msra.mxu0 0.0
    %749 = vmatprep.subr.mxu0 0.0
    %750 = vmatpush1.msra.mxu0 %v79
    %751 = vmatprep.subr.mxu0 0.0
    %752 = vmatpush1.msra.mxu0 %v78
    %753 = vmatprep.subr.mxu0 0.0
    %754 = vmatpush1.msra.mxu0 %v77
    %755 = vmatprep.subr.mxu0 0.0
    %756 = vmatpush1.msra.mxu0 %v76
    %757 = vmatprep.subr.mxu0 0.0
    %758 = vmatpush2.msra.mxu0 0.0
    %759 = vmatprep.subr.mxu0 0.0
    %760 = vmatpush2.msra.mxu0 0.0
    %761 = vmatprep.subr.mxu0 0.0
    %762 = vmatpush2.msra.mxu0 0.0
    %763 = vmatprep.subr.mxu0 0.0
    %764 = vmatpush2.msra.mxu0 0.0
    %765 = vmatprep.subr.mxu0 0.0
    %766 = vmatpush2.msra.mxu0 0.0
    %767 = vmatprep.subr.mxu0 0.0
    %768 = vmatpush2.msra.mxu0 0.0
    %769 = vmatprep.subr.mxu0 0.0
    %770 = vmatpush2.msra.mxu0 0.0
    %771 = vmatprep.subr.mxu0 0.0
    %772 = vmatpush2.msra.mxu0 0.0
    %773 = vmatprep.subr.mxu0 0.0
    %774 = vmatpush2.msra.mxu0 0.0
    %775 = vmatprep.subr.mxu0 0.0
    %776 = vmatpush2.msra.mxu0 0.0
    %777 = vmatprep.subr.mxu0 0.0
    %778 = vmatpush2.msra.mxu0 0.0
    %779 = vmatprep.subr.mxu0 0.0
    %780 = vmatpush2.msra.mxu0 0.0
    %781 = vmatprep.subr.mxu0 0.0
    %782 = vmatpush2.msra.mxu0 0.0
    %783 = vmatprep.subr.mxu0 0.0
    %784 = vmatpush2.msra.mxu0 0.0
    %785 = vmatprep.subr.mxu0 0.0
    %786 = vmatpush2.msra.mxu0 0.0
    %787 = vmatprep.subr.mxu0 0.0
    %788 = vmatpush2.msra.mxu0 0.0
    %789 = vmatprep.mubr.f32.mxu0 0.0
    %790 = vmatmul.mubr.f32.gmra.mxu0 %v628
    %v791 = vpop.f32.mrf.mxu0
    %v792 = vadd.f32 0.0, %v791
    %v793 = vpop.f32.mrf.mxu0
    %794 = vdwg.mxu0
    %796 = vrot.lane.b32.xlu0 %v724, 64
    %v797 = vpop.permute.xlu0 %796
    %v798 = vsel %vm178, %v797, 0
    %800 = vmatprep.subr.mxu0 0.0
    %801 = vmatpush1.msra.mxu0 0.0
    %802 = vmatprep.subr.mxu0 0.0
    %803 = vmatpush1.msra.mxu0 0.0
    %804 = vmatprep.subr.mxu0 0.0
    %805 = vmatpush1.msra.mxu0 0.0
    %806 = vmatprep.subr.mxu0 0.0
    %807 = vmatpush1.msra.mxu0 0.0
    %808 = vmatprep.subr.mxu0 0.0
    %809 = vmatpush1.msra.mxu0 0.0
    %810 = vmatprep.subr.mxu0 0.0
    %811 = vmatpush1.msra.mxu0 0.0
    %812 = vmatprep.subr.mxu0 0.0
    %813 = vmatpush1.msra.mxu0 0.0
    %814 = vmatprep.subr.mxu0 0.0
    %815 = vmatpush1.msra.mxu0 0.0
    %816 = vmatprep.subr.mxu0 0.0
    %817 = vmatpush1.msra.mxu0 0.0
    %818 = vmatprep.subr.mxu0 0.0
    %819 = vmatpush1.msra.mxu0 0.0
    %820 = vmatprep.subr.mxu0 0.0
    %821 = vmatpush1.msra.mxu0 0.0
    %822 = vmatprep.subr.mxu0 0.0
    %823 = vmatpush1.msra.mxu0 0.0
    %824 = vmatprep.subr.mxu0 0.0
    %825 = vmatpush1.msra.mxu0 %v83
    %826 = vmatprep.subr.mxu0 0.0
    %827 = vmatpush1.msra.mxu0 %v82
    %828 = vmatprep.subr.mxu0 0.0
    %829 = vmatpush1.msra.mxu0 %v81
    %830 = vmatprep.subr.mxu0 0.0
    %831 = vmatpush1.msra.mxu0 %v80
    %832 = vmatprep.subr.mxu0 0.0
    %833 = vmatpush2.msra.mxu0 0.0
    %834 = vmatprep.subr.mxu0 0.0
    %835 = vmatpush2.msra.mxu0 0.0
    %836 = vmatprep.subr.mxu0 0.0
    %837 = vmatpush2.msra.mxu0 0.0
    %838 = vmatprep.subr.mxu0 0.0
    %839 = vmatpush2.msra.mxu0 0.0
    %840 = vmatprep.subr.mxu0 0.0
    %841 = vmatpush2.msra.mxu0 0.0
    %842 = vmatprep.subr.mxu0 0.0
    %843 = vmatpush2.msra.mxu0 0.0
    %844 = vmatprep.subr.mxu0 0.0
    %845 = vmatpush2.msra.mxu0 0.0
    %846 = vmatprep.subr.mxu0 0.0
    %847 = vmatpush2.msra.mxu0 0.0
    %848 = vmatprep.subr.mxu0 0.0
    %849 = vmatpush2.msra.mxu0 0.0
    %850 = vmatprep.subr.mxu0 0.0
    %851 = vmatpush2.msra.mxu0 0.0
    %852 = vmatprep.subr.mxu0 0.0
    %853 = vmatpush2.msra.mxu0 0.0
    %854 = vmatprep.subr.mxu0 0.0
    %855 = vmatpush2.msra.mxu0 0.0
    %856 = vmatprep.subr.mxu0 0.0
    %857 = vmatpush2.msra.mxu0 0.0
    %858 = vmatprep.subr.mxu0 0.0
    %859 = vmatpush2.msra.mxu0 0.0
    %860 = vmatprep.subr.mxu0 0.0
    %861 = vmatpush2.msra.mxu0 0.0
    %862 = vmatprep.subr.mxu0 0.0
    %863 = vmatpush2.msra.mxu0 0.0
    %864 = vmatprep.mubr.f32.mxu0 0.0
    %865 = vmatmul.mubr.f32.gmra.mxu0 %v798
    %v866 = vpop.f32.mrf.mxu0
    %v867 = vadd.f32 0.0, %v866
    %v868 = vpop.f32.mrf.mxu0
    %869 = vdwg.mxu0
    %v870 = vld [vmem:[#allocation2 + $0x4] sm:$0x3]
    %v871 = vadd.f32 %v870, %v792
    %v872 = vxor.u32 %v871, 2147483648
    %v873 = vmul.f32 %v872, 1.442695
    %v874 = vpow.pop %v873
    %v875 = vadd.f32 %v874, 1.0
    %v876 = vrcp.pop %v875
    %v877 = vmul.f32 1.0, %v876
    %v878 = vtanh.pop %v871
    %v879 = vmul.f32 %v877, %v618
    %881 = vrot.lane.b32.xlu0 %v878, 32
    %v882 = vpop.permute.xlu0 %881
    %v884 = vmul.f32 %v877, %v882
    %886 = vrot.lane.b32.xlu0 %v884, 32
    %v887 = vpop.permute.xlu0 %886
    %v889 = vadd.f32 %v879, %v887
    %v890 = vtanh.pop %v889
    %892 = vrot.lane.b32.xlu0 %v890, 32
    %v893 = vpop.permute.xlu0 %892
    %v895 = vmul.f32 %v877, %v893
    %897 = vrot.lane.b32.xlu0 %v895, 64
    %v898 = vpop.permute.xlu0 %897
    %v899 = vsel %vm178, %v898, 0
    %901 = vmatprep.subr.mxu0 0.0
    %902 = vmatpush1.msra.mxu0 0.0
    %903 = vmatprep.subr.mxu0 0.0
    %904 = vmatpush1.msra.mxu0 0.0
    %905 = vmatprep.subr.mxu0 0.0
    %906 = vmatpush1.msra.mxu0 0.0
    %907 = vmatprep.subr.mxu0 0.0
    %908 = vmatpush1.msra.mxu0 0.0
    %909 = vmatprep.subr.mxu0 0.0
    %910 = vmatpush1.msra.mxu0 0.0
    %911 = vmatprep.subr.mxu0 0.0
    %912 = vmatpush1.msra.mxu0 0.0
    %913 = vmatprep.subr.mxu0 0.0
    %914 = vmatpush1.msra.mxu0 0.0
    %915 = vmatprep.subr.mxu0 0.0
    %916 = vmatpush1.msra.mxu0 0.0
    %917 = vmatprep.subr.mxu0 0.0
    %918 = vmatpush1.msra.mxu0 0.0
    %919 = vmatprep.subr.mxu0 0.0
    %920 = vmatpush1.msra.mxu0 0.0
    %921 = vmatprep.subr.mxu0 0.0
    %922 = vmatpush1.msra.mxu0 0.0
    %923 = vmatprep.subr.mxu0 0.0
    %924 = vmatpush1.msra.mxu0 0.0
    %925 = vmatprep.subr.mxu0 0.0
    %926 = vmatpush1.msra.mxu0 %v75
    %927 = vmatprep.subr.mxu0 0.0
    %928 = vmatpush1.msra.mxu0 %v74
    %929 = vmatprep.subr.mxu0 0.0
    %930 = vmatpush1.msra.mxu0 %v73
    %931 = vmatprep.subr.mxu0 0.0
    %932 = vmatpush1.msra.mxu0 %v72
    %933 = vmatprep.subr.mxu0 0.0
    %934 = vmatpush2.msra.mxu0 0.0
    %935 = vmatprep.subr.mxu0 0.0
    %936 = vmatpush2.msra.mxu0 0.0
    %937 = vmatprep.subr.mxu0 0.0
    %938 = vmatpush2.msra.mxu0 0.0
    %939 = vmatprep.subr.mxu0 0.0
    %940 = vmatpush2.msra.mxu0 0.0
    %941 = vmatprep.subr.mxu0 0.0
    %942 = vmatpush2.msra.mxu0 0.0
    %943 = vmatprep.subr.mxu0 0.0
    %944 = vmatpush2.msra.mxu0 0.0
    %945 = vmatprep.subr.mxu0 0.0
    %946 = vmatpush2.msra.mxu0 0.0
    %947 = vmatprep.subr.mxu0 0.0
    %948 = vmatpush2.msra.mxu0 0.0
    %949 = vmatprep.subr.mxu0 0.0
    %950 = vmatpush2.msra.mxu0 0.0
    %951 = vmatprep.subr.mxu0 0.0
    %952 = vmatpush2.msra.mxu0 0.0
    %953 = vmatprep.subr.mxu0 0.0
    %954 = vmatpush2.msra.mxu0 0.0
    %955 = vmatprep.subr.mxu0 0.0
    %956 = vmatpush2.msra.mxu0 0.0
    %957 = vmatprep.subr.mxu0 0.0
    %958 = vmatpush2.msra.mxu0 0.0
    %959 = vmatprep.subr.mxu0 0.0
    %960 = vmatpush2.msra.mxu0 0.0
    %961 = vmatprep.subr.mxu0 0.0
    %962 = vmatpush2.msra.mxu0 0.0
    %963 = vmatprep.subr.mxu0 0.0
    %964 = vmatpush2.msra.mxu0 0.0
    %965 = vmatprep.mubr.f32.mxu0 0.0
    %966 = vmatmul.mubr.f32.gmra.mxu0 %v899
    %v967 = vpop.f32.mrf.mxu0
    %v968 = vadd.f32 %v867, %v967
    %v969 = vpop.f32.mrf.mxu0
    %970 = vdwg.mxu0
    %v971 = vadd.f32 %v968, %v427
    %v972 = vxor.u32 %v971, 2147483648
    %v973 = vmul.f32 %v972, 1.442695
    %v974 = vpow.pop %v973
    %v975 = vadd.f32 %v974, 1.0
    %v976 = vrcp.pop %v975
    %v977 = vmul.f32 1.0, %v976
    %v978 = vtanh.pop %v971
    %v979 = vmul.f32 %v977, %v718
    %981 = vrot.lane.b32.xlu0 %v978, 32
    %v982 = vpop.permute.xlu0 %981
    %v984 = vmul.f32 %v977, %v982
    %986 = vrot.lane.b32.xlu0 %v984, 32
    %v987 = vpop.permute.xlu0 %986
    %v989 = vadd.f32 %v979, %v987
    %v990 = vtanh.pop %v989
    %992 = vrot.lane.b32.xlu0 %v990, 32
    %v993 = vpop.permute.xlu0 %992
    %v995 = vmul.f32 %v977, %v993
    %996 = vmatprep.subr.mxu0 0.0
    %997 = vmatpush1.msra.mxu0 0.0
    %998 = vmatprep.subr.mxu0 0.0
    %999 = vmatpush1.msra.mxu0 0.0
    %1000 = vmatprep.subr.mxu0 0.0
    %1001 = vmatpush1.msra.mxu0 0.0
    %1002 = vmatprep.subr.mxu0 0.0
    %1003 = vmatpush1.msra.mxu0 0.0
    %1004 = vmatprep.subr.mxu0 0.0
    %1005 = vmatpush1.msra.mxu0 0.0
    %1006 = vmatprep.subr.mxu0 0.0
    %1007 = vmatpush1.msra.mxu0 0.0
    %1008 = vmatprep.subr.mxu0 0.0
    %1009 = vmatpush1.msra.mxu0 0.0
    %1010 = vmatprep.subr.mxu0 0.0
    %1011 = vmatpush1.msra.mxu0 0.0
    %1012 = vmatprep.subr.mxu0 0.0
    %1013 = vmatpush1.msra.mxu0 0.0
    %1014 = vmatprep.subr.mxu0 0.0
    %1015 = vmatpush1.msra.mxu0 0.0
    %1016 = vmatprep.subr.mxu0 0.0
    %1017 = vmatpush1.msra.mxu0 0.0
    %1018 = vmatprep.subr.mxu0 0.0
    %1019 = vmatpush1.msra.mxu0 0.0
    %1020 = vmatprep.subr.mxu0 0.0
    %1021 = vmatpush1.msra.mxu0 %v79
    %1022 = vmatprep.subr.mxu0 0.0
    %1023 = vmatpush1.msra.mxu0 %v78
    %1024 = vmatprep.subr.mxu0 0.0
    %1025 = vmatpush1.msra.mxu0 %v77
    %1026 = vmatprep.subr.mxu0 0.0
    %1027 = vmatpush1.msra.mxu0 %v76
    %1028 = vmatprep.subr.mxu0 0.0
    %1029 = vmatpush2.msra.mxu0 0.0
    %1030 = vmatprep.subr.mxu0 0.0
    %1031 = vmatpush2.msra.mxu0 0.0
    %1032 = vmatprep.subr.mxu0 0.0
    %1033 = vmatpush2.msra.mxu0 0.0
    %1034 = vmatprep.subr.mxu0 0.0
    %1035 = vmatpush2.msra.mxu0 0.0
    %1036 = vmatprep.subr.mxu0 0.0
    %1037 = vmatpush2.msra.mxu0 0.0
    %1038 = vmatprep.subr.mxu0 0.0
    %1039 = vmatpush2.msra.mxu0 0.0
    %1040 = vmatprep.subr.mxu0 0.0
    %1041 = vmatpush2.msra.mxu0 0.0
    %1042 = vmatprep.subr.mxu0 0.0
    %1043 = vmatpush2.msra.mxu0 0.0
    %1044 = vmatprep.subr.mxu0 0.0
    %1045 = vmatpush2.msra.mxu0 0.0
    %1046 = vmatprep.subr.mxu0 0.0
    %1047 = vmatpush2.msra.mxu0 0.0
    %1048 = vmatprep.subr.mxu0 0.0
    %1049 = vmatpush2.msra.mxu0 0.0
    %1050 = vmatprep.subr.mxu0 0.0
    %1051 = vmatpush2.msra.mxu0 0.0
    %1052 = vmatprep.subr.mxu0 0.0
    %1053 = vmatpush2.msra.mxu0 0.0
    %1054 = vmatprep.subr.mxu0 0.0
    %1055 = vmatpush2.msra.mxu0 0.0
    %1056 = vmatprep.subr.mxu0 0.0
    %1057 = vmatpush2.msra.mxu0 0.0
    %1058 = vmatprep.subr.mxu0 0.0
    %1059 = vmatpush2.msra.mxu0 0.0
    %1060 = vmatprep.mubr.f32.mxu0 0.0
    %1061 = vmatmul.mubr.f32.gmra.mxu0 %v899
    %v1062 = vpop.f32.mrf.mxu0
    %v1063 = vadd.f32 0.0, %v1062
    %v1064 = vpop.f32.mrf.mxu0
    %1065 = vdwg.mxu0
    %1067 = vrot.lane.b32.xlu0 %v995, 64
    %v1068 = vpop.permute.xlu0 %1067
    %v1069 = vsel %vm178, %v1068, 0
    %1071 = vmatprep.subr.mxu0 0.0
    %1072 = vmatpush1.msra.mxu0 0.0
    %1073 = vmatprep.subr.mxu0 0.0
    %1074 = vmatpush1.msra.mxu0 0.0
    %1075 = vmatprep.subr.mxu0 0.0
    %1076 = vmatpush1.msra.mxu0 0.0
    %1077 = vmatprep.subr.mxu0 0.0
    %1078 = vmatpush1.msra.mxu0 0.0
    %1079 = vmatprep.subr.mxu0 0.0
    %1080 = vmatpush1.msra.mxu0 0.0
    %1081 = vmatprep.subr.mxu0 0.0
    %1082 = vmatpush1.msra.mxu0 0.0
    %1083 = vmatprep.subr.mxu0 0.0
    %1084 = vmatpush1.msra.mxu0 0.0
    %1085 = vmatprep.subr.mxu0 0.0
    %1086 = vmatpush1.msra.mxu0 0.0
    %1087 = vmatprep.subr.mxu0 0.0
    %1088 = vmatpush1.msra.mxu0 0.0
    %1089 = vmatprep.subr.mxu0 0.0
    %1090 = vmatpush1.msra.mxu0 0.0
    %1091 = vmatprep.subr.mxu0 0.0
    %1092 = vmatpush1.msra.mxu0 0.0
    %1093 = vmatprep.subr.mxu0 0.0
    %1094 = vmatpush1.msra.mxu0 0.0
    %1095 = vmatprep.subr.mxu0 0.0
    %1096 = vmatpush1.msra.mxu0 %v83
    %1097 = vmatprep.subr.mxu0 0.0
    %1098 = vmatpush1.msra.mxu0 %v82
    %1099 = vmatprep.subr.mxu0 0.0
    %1100 = vmatpush1.msra.mxu0 %v81
    %1101 = vmatprep.subr.mxu0 0.0
    %1102 = vmatpush1.msra.mxu0 %v80
    %1103 = vmatprep.subr.mxu0 0.0
    %1104 = vmatpush2.msra.mxu0 0.0
    %1105 = vmatprep.subr.mxu0 0.0
    %1106 = vmatpush2.msra.mxu0 0.0
    %1107 = vmatprep.subr.mxu0 0.0
    %1108 = vmatpush2.msra.mxu0 0.0
    %1109 = vmatprep.subr.mxu0 0.0
    %1110 = vmatpush2.msra.mxu0 0.0
    %1111 = vmatprep.subr.mxu0 0.0
    %1112 = vmatpush2.msra.mxu0 0.0
    %1113 = vmatprep.subr.mxu0 0.0
    %1114 = vmatpush2.msra.mxu0 0.0
    %1115 = vmatprep.subr.mxu0 0.0
    %1116 = vmatpush2.msra.mxu0 0.0
    %1117 = vmatprep.subr.mxu0 0.0
    %1118 = vmatpush2.msra.mxu0 0.0
    %1119 = vmatprep.subr.mxu0 0.0
    %1120 = vmatpush2.msra.mxu0 0.0
    %1121 = vmatprep.subr.mxu0 0.0
    %1122 = vmatpush2.msra.mxu0 0.0
    %1123 = vmatprep.subr.mxu0 0.0
    %1124 = vmatpush2.msra.mxu0 0.0
    %1125 = vmatprep.subr.mxu0 0.0
    %1126 = vmatpush2.msra.mxu0 0.0
    %1127 = vmatprep.subr.mxu0 0.0
    %1128 = vmatpush2.msra.mxu0 0.0
    %1129 = vmatprep.subr.mxu0 0.0
    %1130 = vmatpush2.msra.mxu0 0.0
    %1131 = vmatprep.subr.mxu0 0.0
    %1132 = vmatpush2.msra.mxu0 0.0
    %1133 = vmatprep.subr.mxu0 0.0
    %1134 = vmatpush2.msra.mxu0 0.0
    %1135 = vmatprep.mubr.f32.mxu0 0.0
    %1136 = vmatmul.mubr.f32.gmra.mxu0 %v1069
    %v1137 = vpop.f32.mrf.mxu0
    %v1138 = vadd.f32 0.0, %v1137
    %v1139 = vpop.f32.mrf.mxu0
    %1140 = vdwg.mxu0
    %v1141 = vld [vmem:[#allocation2 + $0x6] sm:$0x3]
    %v1142 = vadd.f32 %v1141, %v1063
    %v1143 = vxor.u32 %v1142, 2147483648
    %v1144 = vmul.f32 %v1143, 1.442695
    %v1145 = vpow.pop %v1144
    %v1146 = vadd.f32 %v1145, 1.0
    %v1147 = vrcp.pop %v1146
    %v1148 = vmul.f32 1.0, %v1147
    %v1149 = vtanh.pop %v1142
    %v1150 = vmul.f32 %v1148, %v889
    %1152 = vrot.lane.b32.xlu0 %v1149, 32
    %v1153 = vpop.permute.xlu0 %1152
    %v1155 = vmul.f32 %v1148, %v1153
    %1157 = vrot.lane.b32.xlu0 %v1155, 32
    %v1158 = vpop.permute.xlu0 %1157
    %v1160 = vadd.f32 %v1150, %v1158
    %v1161 = vtanh.pop %v1160
    %1163 = vrot.lane.b32.xlu0 %v1161, 32
    %v1164 = vpop.permute.xlu0 %1163
    %v1166 = vmul.f32 %v1148, %v1164
    %1168 = vrot.lane.b32.xlu0 %v1166, 64
    %v1169 = vpop.permute.xlu0 %1168
    %v1170 = vsel %vm178, %v1169, 0
    %1172 = vmatprep.subr.mxu0 0.0
    %1173 = vmatpush1.msra.mxu0 0.0
    %1174 = vmatprep.subr.mxu0 0.0
    %1175 = vmatpush1.msra.mxu0 0.0
    %1176 = vmatprep.subr.mxu0 0.0
    %1177 = vmatpush1.msra.mxu0 0.0
    %1178 = vmatprep.subr.mxu0 0.0
    %1179 = vmatpush1.msra.mxu0 0.0
    %1180 = vmatprep.subr.mxu0 0.0
    %1181 = vmatpush1.msra.mxu0 0.0
    %1182 = vmatprep.subr.mxu0 0.0
    %1183 = vmatpush1.msra.mxu0 0.0
    %1184 = vmatprep.subr.mxu0 0.0
    %1185 = vmatpush1.msra.mxu0 0.0
    %1186 = vmatprep.subr.mxu0 0.0
    %1187 = vmatpush1.msra.mxu0 0.0
    %1188 = vmatprep.subr.mxu0 0.0
    %1189 = vmatpush1.msra.mxu0 0.0
    %1190 = vmatprep.subr.mxu0 0.0
    %1191 = vmatpush1.msra.mxu0 0.0
    %1192 = vmatprep.subr.mxu0 0.0
    %1193 = vmatpush1.msra.mxu0 0.0
    %1194 = vmatprep.subr.mxu0 0.0
    %1195 = vmatpush1.msra.mxu0 0.0
    %1196 = vmatprep.subr.mxu0 0.0
    %1197 = vmatpush1.msra.mxu0 %v75
    %1198 = vmatprep.subr.mxu0 0.0
    %1199 = vmatpush1.msra.mxu0 %v74
    %1200 = vmatprep.subr.mxu0 0.0
    %1201 = vmatpush1.msra.mxu0 %v73
    %1202 = vmatprep.subr.mxu0 0.0
    %1203 = vmatpush1.msra.mxu0 %v72
    %1204 = vmatprep.subr.mxu0 0.0
    %1205 = vmatpush2.msra.mxu0 0.0
    %1206 = vmatprep.subr.mxu0 0.0
    %1207 = vmatpush2.msra.mxu0 0.0
    %1208 = vmatprep.subr.mxu0 0.0
    %1209 = vmatpush2.msra.mxu0 0.0
    %1210 = vmatprep.subr.mxu0 0.0
    %1211 = vmatpush2.msra.mxu0 0.0
    %1212 = vmatprep.subr.mxu0 0.0
    %1213 = vmatpush2.msra.mxu0 0.0
    %1214 = vmatprep.subr.mxu0 0.0
    %1215 = vmatpush2.msra.mxu0 0.0
    %1216 = vmatprep.subr.mxu0 0.0
    %1217 = vmatpush2.msra.mxu0 0.0
    %1218 = vmatprep.subr.mxu0 0.0
    %1219 = vmatpush2.msra.mxu0 0.0
    %1220 = vmatprep.subr.mxu0 0.0
    %1221 = vmatpush2.msra.mxu0 0.0
    %1222 = vmatprep.subr.mxu0 0.0
    %1223 = vmatpush2.msra.mxu0 0.0
    %1224 = vmatprep.subr.mxu0 0.0
    %1225 = vmatpush2.msra.mxu0 0.0
    %1226 = vmatprep.subr.mxu0 0.0
    %1227 = vmatpush2.msra.mxu0 0.0
    %1228 = vmatprep.subr.mxu0 0.0
    %1229 = vmatpush2.msra.mxu0 0.0
    %1230 = vmatprep.subr.mxu0 0.0
    %1231 = vmatpush2.msra.mxu0 0.0
    %1232 = vmatprep.subr.mxu0 0.0
    %1233 = vmatpush2.msra.mxu0 0.0
    %1234 = vmatprep.subr.mxu0 0.0
    %1235 = vmatpush2.msra.mxu0 0.0
    %1236 = vmatprep.mubr.f32.mxu0 0.0
    %1237 = vmatmul.mubr.f32.gmra.mxu0 %v1170
    %v1238 = vpop.f32.mrf.mxu0
    %v1239 = vadd.f32 %v1138, %v1238
    %v1240 = vpop.f32.mrf.mxu0
    %1241 = vdwg.mxu0
    %v1242 = vadd.f32 %v1239, %v427
    %v1243 = vxor.u32 %v1242, 2147483648
    %v1244 = vmul.f32 %v1243, 1.442695
    %v1245 = vpow.pop %v1244
    %v1246 = vadd.f32 %v1245, 1.0
    %v1247 = vrcp.pop %v1246
    %v1248 = vmul.f32 1.0, %v1247
    %v1249 = vtanh.pop %v1242
    %v1250 = vmul.f32 %v1248, %v989
    %1252 = vrot.lane.b32.xlu0 %v1249, 32
    %v1253 = vpop.permute.xlu0 %1252
    %v1255 = vmul.f32 %v1248, %v1253
    %1257 = vrot.lane.b32.xlu0 %v1255, 32
    %v1258 = vpop.permute.xlu0 %1257
    %v1260 = vadd.f32 %v1250, %v1258
    %v1261 = vtanh.pop %v1260
    %1263 = vrot.lane.b32.xlu0 %v1261, 32
    %v1264 = vpop.permute.xlu0 %1263
    %v1266 = vmul.f32 %v1248, %v1264
    %1267 = vmatprep.subr.mxu0 0.0
    %1268 = vmatpush1.msra.mxu0 0.0
    %1269 = vmatprep.subr.mxu0 0.0
    %1270 = vmatpush1.msra.mxu0 0.0
    %1271 = vmatprep.subr.mxu0 0.0
    %1272 = vmatpush1.msra.mxu0 0.0
    %1273 = vmatprep.subr.mxu0 0.0
    %1274 = vmatpush1.msra.mxu0 0.0
    %1275 = vmatprep.subr.mxu0 0.0
    %1276 = vmatpush1.msra.mxu0 0.0
    %1277 = vmatprep.subr.mxu0 0.0
    %1278 = vmatpush1.msra.mxu0 0.0
    %1279 = vmatprep.subr.mxu0 0.0
    %1280 = vmatpush1.msra.mxu0 0.0
    %1281 = vmatprep.subr.mxu0 0.0
    %1282 = vmatpush1.msra.mxu0 0.0
    %1283 = vmatprep.subr.mxu0 0.0
    %1284 = vmatpush1.msra.mxu0 0.0
    %1285 = vmatprep.subr.mxu0 0.0
    %1286 = vmatpush1.msra.mxu0 0.0
    %1287 = vmatprep.subr.mxu0 0.0
    %1288 = vmatpush1.msra.mxu0 0.0
    %1289 = vmatprep.subr.mxu0 0.0
    %1290 = vmatpush1.msra.mxu0 0.0
    %1291 = vmatprep.subr.mxu0 0.0
    %1292 = vmatpush1.msra.mxu0 %v79
    %1293 = vmatprep.subr.mxu0 0.0
    %1294 = vmatpush1.msra.mxu0 %v78
    %1295 = vmatprep.subr.mxu0 0.0
    %1296 = vmatpush1.msra.mxu0 %v77
    %1297 = vmatprep.subr.mxu0 0.0
    %1298 = vmatpush1.msra.mxu0 %v76
    %1299 = vmatprep.subr.mxu0 0.0
    %1300 = vmatpush2.msra.mxu0 0.0
    %1301 = vmatprep.subr.mxu0 0.0
    %1302 = vmatpush2.msra.mxu0 0.0
    %1303 = vmatprep.subr.mxu0 0.0
    %1304 = vmatpush2.msra.mxu0 0.0
    %1305 = vmatprep.subr.mxu0 0.0
    %1306 = vmatpush2.msra.mxu0 0.0
    %1307 = vmatprep.subr.mxu0 0.0
    %1308 = vmatpush2.msra.mxu0 0.0
    %1309 = vmatprep.subr.mxu0 0.0
    %1310 = vmatpush2.msra.mxu0 0.0
    %1311 = vmatprep.subr.mxu0 0.0
    %1312 = vmatpush2.msra.mxu0 0.0
    %1313 = vmatprep.subr.mxu0 0.0
    %1314 = vmatpush2.msra.mxu0 0.0
    %1315 = vmatprep.subr.mxu0 0.0
    %1316 = vmatpush2.msra.mxu0 0.0
    %1317 = vmatprep.subr.mxu0 0.0
    %1318 = vmatpush2.msra.mxu0 0.0
    %1319 = vmatprep.subr.mxu0 0.0
    %1320 = vmatpush2.msra.mxu0 0.0
    %1321 = vmatprep.subr.mxu0 0.0
    %1322 = vmatpush2.msra.mxu0 0.0
    %1323 = vmatprep.subr.mxu0 0.0
    %1324 = vmatpush2.msra.mxu0 0.0
    %1325 = vmatprep.subr.mxu0 0.0
    %1326 = vmatpush2.msra.mxu0 0.0
    %1327 = vmatprep.subr.mxu0 0.0
    %1328 = vmatpush2.msra.mxu0 0.0
    %1329 = vmatprep.subr.mxu0 0.0
    %1330 = vmatpush2.msra.mxu0 0.0
    %1331 = vmatprep.mubr.f32.mxu0 0.0
    %1332 = vmatmul.mubr.f32.gmra.mxu0 %v1170
    %v1333 = vpop.f32.mrf.mxu0
    %v1334 = vadd.f32 0.0, %v1333
    %v1335 = vpop.f32.mrf.mxu0
    %1336 = vdwg.mxu0
    %1338 = vrot.lane.b32.xlu0 %v1266, 64
    %v1339 = vpop.permute.xlu0 %1338
    %v1340 = vsel %vm178, %v1339, 0
    %1342 = vmatprep.subr.mxu0 0.0
    %1343 = vmatpush1.msra.mxu0 0.0
    %1344 = vmatprep.subr.mxu0 0.0
    %1345 = vmatpush1.msra.mxu0 0.0
    %1346 = vmatprep.subr.mxu0 0.0
    %1347 = vmatpush1.msra.mxu0 0.0
    %1348 = vmatprep.subr.mxu0 0.0
    %1349 = vmatpush1.msra.mxu0 0.0
    %1350 = vmatprep.subr.mxu0 0.0
    %1351 = vmatpush1.msra.mxu0 0.0
    %1352 = vmatprep.subr.mxu0 0.0
    %1353 = vmatpush1.msra.mxu0 0.0
    %1354 = vmatprep.subr.mxu0 0.0
    %1355 = vmatpush1.msra.mxu0 0.0
    %1356 = vmatprep.subr.mxu0 0.0
    %1357 = vmatpush1.msra.mxu0 0.0
    %1358 = vmatprep.subr.mxu0 0.0
    %1359 = vmatpush1.msra.mxu0 0.0
    %1360 = vmatprep.subr.mxu0 0.0
    %1361 = vmatpush1.msra.mxu0 0.0
    %1362 = vmatprep.subr.mxu0 0.0
    %1363 = vmatpush1.msra.mxu0 0.0
    %1364 = vmatprep.subr.mxu0 0.0
    %1365 = vmatpush1.msra.mxu0 0.0
    %1366 = vmatprep.subr.mxu0 0.0
    %1367 = vmatpush1.msra.mxu0 %v83
    %1368 = vmatprep.subr.mxu0 0.0
    %1369 = vmatpush1.msra.mxu0 %v82
    %1370 = vmatprep.subr.mxu0 0.0
    %1371 = vmatpush1.msra.mxu0 %v81
    %1372 = vmatprep.subr.mxu0 0.0
    %1373 = vmatpush1.msra.mxu0 %v80
    %1374 = vmatprep.subr.mxu0 0.0
    %1375 = vmatpush2.msra.mxu0 0.0
    %1376 = vmatprep.subr.mxu0 0.0
    %1377 = vmatpush2.msra.mxu0 0.0
    %1378 = vmatprep.subr.mxu0 0.0
    %1379 = vmatpush2.msra.mxu0 0.0
    %1380 = vmatprep.subr.mxu0 0.0
    %1381 = vmatpush2.msra.mxu0 0.0
    %1382 = vmatprep.subr.mxu0 0.0
    %1383 = vmatpush2.msra.mxu0 0.0
    %1384 = vmatprep.subr.mxu0 0.0
    %1385 = vmatpush2.msra.mxu0 0.0
    %1386 = vmatprep.subr.mxu0 0.0
    %1387 = vmatpush2.msra.mxu0 0.0
    %1388 = vmatprep.subr.mxu0 0.0
    %1389 = vmatpush2.msra.mxu0 0.0
    %1390 = vmatprep.subr.mxu0 0.0
    %1391 = vmatpush2.msra.mxu0 0.0
    %1392 = vmatprep.subr.mxu0 0.0
    %1393 = vmatpush2.msra.mxu0 0.0
    %1394 = vmatprep.subr.mxu0 0.0
    %1395 = vmatpush2.msra.mxu0 0.0
    %1396 = vmatprep.subr.mxu0 0.0
    %1397 = vmatpush2.msra.mxu0 0.0
    %1398 = vmatprep.subr.mxu0 0.0
    %1399 = vmatpush2.msra.mxu0 0.0
    %1400 = vmatprep.subr.mxu0 0.0
    %1401 = vmatpush2.msra.mxu0 0.0
    %1402 = vmatprep.subr.mxu0 0.0
    %1403 = vmatpush2.msra.mxu0 0.0
    %1404 = vmatprep.subr.mxu0 0.0
    %1405 = vmatpush2.msra.mxu0 0.0
    %1406 = vmatprep.mubr.f32.mxu0 0.0
    %1407 = vmatmul.mubr.f32.gmra.mxu0 %v1340
    %v1408 = vpop.f32.mrf.mxu0
    %v1409 = vadd.f32 0.0, %v1408
    %v1410 = vpop.f32.mrf.mxu0
    %1411 = vdwg.mxu0
    %v1412 = vld [vmem:[#allocation2 + $0x8] sm:$0x3]
    %v1413 = vadd.f32 %v1412, %v1334
    %v1414 = vxor.u32 %v1413, 2147483648
    %v1415 = vmul.f32 %v1414, 1.442695
    %v1416 = vpow.pop %v1415
    %v1417 = vadd.f32 %v1416, 1.0
    %v1418 = vrcp.pop %v1417
    %v1419 = vmul.f32 1.0, %v1418
    %v1420 = vtanh.pop %v1413
    %v1421 = vmul.f32 %v1419, %v1160
    %1423 = vrot.lane.b32.xlu0 %v1420, 32
    %v1424 = vpop.permute.xlu0 %1423
    %v1426 = vmul.f32 %v1419, %v1424
    %1428 = vrot.lane.b32.xlu0 %v1426, 32
    %v1429 = vpop.permute.xlu0 %1428
    %v1431 = vadd.f32 %v1421, %v1429
    %v1432 = vtanh.pop %v1431
    %1434 = vrot.lane.b32.xlu0 %v1432, 32
    %v1435 = vpop.permute.xlu0 %1434
    %v1437 = vmul.f32 %v1419, %v1435
    %1439 = vrot.lane.b32.xlu0 %v1437, 64
    %v1440 = vpop.permute.xlu0 %1439
    %v1441 = vsel %vm178, %v1440, 0
    %1443 = vmatprep.subr.mxu0 0.0
    %1444 = vmatpush1.msra.mxu0 0.0
    %1445 = vmatprep.subr.mxu0 0.0
    %1446 = vmatpush1.msra.mxu0 0.0
    %1447 = vmatprep.subr.mxu0 0.0
    %1448 = vmatpush1.msra.mxu0 0.0
    %1449 = vmatprep.subr.mxu0 0.0
    %1450 = vmatpush1.msra.mxu0 0.0
    %1451 = vmatprep.subr.mxu0 0.0
    %1452 = vmatpush1.msra.mxu0 0.0
    %1453 = vmatprep.subr.mxu0 0.0
    %1454 = vmatpush1.msra.mxu0 0.0
    %1455 = vmatprep.subr.mxu0 0.0
    %1456 = vmatpush1.msra.mxu0 0.0
    %1457 = vmatprep.subr.mxu0 0.0
    %1458 = vmatpush1.msra.mxu0 0.0
    %1459 = vmatprep.subr.mxu0 0.0
    %1460 = vmatpush1.msra.mxu0 0.0
    %1461 = vmatprep.subr.mxu0 0.0
    %1462 = vmatpush1.msra.mxu0 0.0
    %1463 = vmatprep.subr.mxu0 0.0
    %1464 = vmatpush1.msra.mxu0 0.0
    %1465 = vmatprep.subr.mxu0 0.0
    %1466 = vmatpush1.msra.mxu0 0.0
    %1467 = vmatprep.subr.mxu0 0.0
    %1468 = vmatpush1.msra.mxu0 %v75
    %1469 = vmatprep.subr.mxu0 0.0
    %1470 = vmatpush1.msra.mxu0 %v74
    %1471 = vmatprep.subr.mxu0 0.0
    %1472 = vmatpush1.msra.mxu0 %v73
    %1473 = vmatprep.subr.mxu0 0.0
    %1474 = vmatpush1.msra.mxu0 %v72
    %1475 = vmatprep.subr.mxu0 0.0
    %1476 = vmatpush2.msra.mxu0 0.0
    %1477 = vmatprep.subr.mxu0 0.0
    %1478 = vmatpush2.msra.mxu0 0.0
    %1479 = vmatprep.subr.mxu0 0.0
    %1480 = vmatpush2.msra.mxu0 0.0
    %1481 = vmatprep.subr.mxu0 0.0
    %1482 = vmatpush2.msra.mxu0 0.0
    %1483 = vmatprep.subr.mxu0 0.0
    %1484 = vmatpush2.msra.mxu0 0.0
    %1485 = vmatprep.subr.mxu0 0.0
    %1486 = vmatpush2.msra.mxu0 0.0
    %1487 = vmatprep.subr.mxu0 0.0
    %1488 = vmatpush2.msra.mxu0 0.0
    %1489 = vmatprep.subr.mxu0 0.0
    %1490 = vmatpush2.msra.mxu0 0.0
    %1491 = vmatprep.subr.mxu0 0.0
    %1492 = vmatpush2.msra.mxu0 0.0
    %1493 = vmatprep.subr.mxu0 0.0
    %1494 = vmatpush2.msra.mxu0 0.0
    %1495 = vmatprep.subr.mxu0 0.0
    %1496 = vmatpush2.msra.mxu0 0.0
    %1497 = vmatprep.subr.mxu0 0.0
    %1498 = vmatpush2.msra.mxu0 0.0
    %1499 = vmatprep.subr.mxu0 0.0
    %1500 = vmatpush2.msra.mxu0 0.0
    %1501 = vmatprep.subr.mxu0 0.0
    %1502 = vmatpush2.msra.mxu0 0.0
    %1503 = vmatprep.subr.mxu0 0.0
    %1504 = vmatpush2.msra.mxu0 0.0
    %1505 = vmatprep.subr.mxu0 0.0
    %1506 = vmatpush2.msra.mxu0 0.0
    %1507 = vmatprep.mubr.f32.mxu0 0.0
    %1508 = vmatmul.mubr.f32.gmra.mxu0 %v1441
    %v1509 = vpop.f32.mrf.mxu0
    %v1510 = vadd.f32 %v1409, %v1509
    %v1511 = vpop.f32.mrf.mxu0
    %1512 = vdwg.mxu0
    %v1513 = vadd.f32 %v1510, %v427
    %v1514 = vxor.u32 %v1513, 2147483648
    %v1515 = vmul.f32 %v1514, 1.442695
    %v1516 = vpow.pop %v1515
    %v1517 = vadd.f32 %v1516, 1.0
    %v1518 = vrcp.pop %v1517
    %v1519 = vmul.f32 1.0, %v1518
    %v1520 = vtanh.pop %v1513
    %v1521 = vmul.f32 %v1519, %v1260
    %1523 = vrot.lane.b32.xlu0 %v1520, 32
    %v1524 = vpop.permute.xlu0 %1523
    %v1526 = vmul.f32 %v1519, %v1524
    %1528 = vrot.lane.b32.xlu0 %v1526, 32
    %v1529 = vpop.permute.xlu0 %1528
    %v1531 = vadd.f32 %v1521, %v1529
    %v1532 = vtanh.pop %v1531
    %1534 = vrot.lane.b32.xlu0 %v1532, 32
    %v1535 = vpop.permute.xlu0 %1534
    %v1537 = vmul.f32 %v1519, %v1535
    %1538 = vmatprep.subr.mxu0 0.0
    %1539 = vmatpush1.msra.mxu0 0.0
    %1540 = vmatprep.subr.mxu0 0.0
    %1541 = vmatpush1.msra.mxu0 0.0
    %1542 = vmatprep.subr.mxu0 0.0
    %1543 = vmatpush1.msra.mxu0 0.0
    %1544 = vmatprep.subr.mxu0 0.0
    %1545 = vmatpush1.msra.mxu0 0.0
    %1546 = vmatprep.subr.mxu0 0.0
    %1547 = vmatpush1.msra.mxu0 0.0
    %1548 = vmatprep.subr.mxu0 0.0
    %1549 = vmatpush1.msra.mxu0 0.0
    %1550 = vmatprep.subr.mxu0 0.0
    %1551 = vmatpush1.msra.mxu0 0.0
    %1552 = vmatprep.subr.mxu0 0.0
    %1553 = vmatpush1.msra.mxu0 0.0
    %1554 = vmatprep.subr.mxu0 0.0
    %1555 = vmatpush1.msra.mxu0 0.0
    %1556 = vmatprep.subr.mxu0 0.0
    %1557 = vmatpush1.msra.mxu0 0.0
    %1558 = vmatprep.subr.mxu0 0.0
    %1559 = vmatpush1.msra.mxu0 0.0
    %1560 = vmatprep.subr.mxu0 0.0
    %1561 = vmatpush1.msra.mxu0 0.0
    %1562 = vmatprep.subr.mxu0 0.0
    %1563 = vmatpush1.msra.mxu0 %v79
    %1564 = vmatprep.subr.mxu0 0.0
    %1565 = vmatpush1.msra.mxu0 %v78
    %1566 = vmatprep.subr.mxu0 0.0
    %1567 = vmatpush1.msra.mxu0 %v77
    %1568 = vmatprep.subr.mxu0 0.0
    %1569 = vmatpush1.msra.mxu0 %v76
    %1570 = vmatprep.subr.mxu0 0.0
    %1571 = vmatpush2.msra.mxu0 0.0
    %1572 = vmatprep.subr.mxu0 0.0
    %1573 = vmatpush2.msra.mxu0 0.0
    %1574 = vmatprep.subr.mxu0 0.0
    %1575 = vmatpush2.msra.mxu0 0.0
    %1576 = vmatprep.subr.mxu0 0.0
    %1577 = vmatpush2.msra.mxu0 0.0
    %1578 = vmatprep.subr.mxu0 0.0
    %1579 = vmatpush2.msra.mxu0 0.0
    %1580 = vmatprep.subr.mxu0 0.0
    %1581 = vmatpush2.msra.mxu0 0.0
    %1582 = vmatprep.subr.mxu0 0.0
    %1583 = vmatpush2.msra.mxu0 0.0
    %1584 = vmatprep.subr.mxu0 0.0
    %1585 = vmatpush2.msra.mxu0 0.0
    %1586 = vmatprep.subr.mxu0 0.0
    %1587 = vmatpush2.msra.mxu0 0.0
    %1588 = vmatprep.subr.mxu0 0.0
    %1589 = vmatpush2.msra.mxu0 0.0
    %1590 = vmatprep.subr.mxu0 0.0
    %1591 = vmatpush2.msra.mxu0 0.0
    %1592 = vmatprep.subr.mxu0 0.0
    %1593 = vmatpush2.msra.mxu0 0.0
    %1594 = vmatprep.subr.mxu0 0.0
    %1595 = vmatpush2.msra.mxu0 0.0
    %1596 = vmatprep.subr.mxu0 0.0
    %1597 = vmatpush2.msra.mxu0 0.0
    %1598 = vmatprep.subr.mxu0 0.0
    %1599 = vmatpush2.msra.mxu0 0.0
    %1600 = vmatprep.subr.mxu0 0.0
    %1601 = vmatpush2.msra.mxu0 0.0
    %1602 = vmatprep.mubr.f32.mxu0 0.0
    %1603 = vmatmul.mubr.f32.gmra.mxu0 %v1441
    %v1604 = vpop.f32.mrf.mxu0
    %v1605 = vadd.f32 0.0, %v1604
    %v1606 = vpop.f32.mrf.mxu0
    %1607 = vdwg.mxu0
    %1609 = vrot.lane.b32.xlu0 %v1537, 64
    %v1610 = vpop.permute.xlu0 %1609
    %v1611 = vsel %vm178, %v1610, 0
    %1613 = vmatprep.subr.mxu0 0.0
    %1614 = vmatpush1.msra.mxu0 0.0
    %1615 = vmatprep.subr.mxu0 0.0
    %1616 = vmatpush1.msra.mxu0 0.0
    %1617 = vmatprep.subr.mxu0 0.0
    %1618 = vmatpush1.msra.mxu0 0.0
    %1619 = vmatprep.subr.mxu0 0.0
    %1620 = vmatpush1.msra.mxu0 0.0
    %1621 = vmatprep.subr.mxu0 0.0
    %1622 = vmatpush1.msra.mxu0 0.0
    %1623 = vmatprep.subr.mxu0 0.0
    %1624 = vmatpush1.msra.mxu0 0.0
    %1625 = vmatprep.subr.mxu0 0.0
    %1626 = vmatpush1.msra.mxu0 0.0
    %1627 = vmatprep.subr.mxu0 0.0
    %1628 = vmatpush1.msra.mxu0 0.0
    %1629 = vmatprep.subr.mxu0 0.0
    %1630 = vmatpush1.msra.mxu0 0.0
    %1631 = vmatprep.subr.mxu0 0.0
    %1632 = vmatpush1.msra.mxu0 0.0
    %1633 = vmatprep.subr.mxu0 0.0
    %1634 = vmatpush1.msra.mxu0 0.0
    %1635 = vmatprep.subr.mxu0 0.0
    %1636 = vmatpush1.msra.mxu0 0.0
    %1637 = vmatprep.subr.mxu0 0.0
    %1638 = vmatpush1.msra.mxu0 %v83
    %1639 = vmatprep.subr.mxu0 0.0
    %1640 = vmatpush1.msra.mxu0 %v82
    %1641 = vmatprep.subr.mxu0 0.0
    %1642 = vmatpush1.msra.mxu0 %v81
    %1643 = vmatprep.subr.mxu0 0.0
    %1644 = vmatpush1.msra.mxu0 %v80
    %1645 = vmatprep.subr.mxu0 0.0
    %1646 = vmatpush2.msra.mxu0 0.0
    %1647 = vmatprep.subr.mxu0 0.0
    %1648 = vmatpush2.msra.mxu0 0.0
    %1649 = vmatprep.subr.mxu0 0.0
    %1650 = vmatpush2.msra.mxu0 0.0
    %1651 = vmatprep.subr.mxu0 0.0
    %1652 = vmatpush2.msra.mxu0 0.0
    %1653 = vmatprep.subr.mxu0 0.0
    %1654 = vmatpush2.msra.mxu0 0.0
    %1655 = vmatprep.subr.mxu0 0.0
    %1656 = vmatpush2.msra.mxu0 0.0
    %1657 = vmatprep.subr.mxu0 0.0
    %1658 = vmatpush2.msra.mxu0 0.0
    %1659 = vmatprep.subr.mxu0 0.0
    %1660 = vmatpush2.msra.mxu0 0.0
    %1661 = vmatprep.subr.mxu0 0.0
    %1662 = vmatpush2.msra.mxu0 0.0
    %1663 = vmatprep.subr.mxu0 0.0
    %1664 = vmatpush2.msra.mxu0 0.0
    %1665 = vmatprep.subr.mxu0 0.0
    %1666 = vmatpush2.msra.mxu0 0.0
    %1667 = vmatprep.subr.mxu0 0.0
    %1668 = vmatpush2.msra.mxu0 0.0
    %1669 = vmatprep.subr.mxu0 0.0
    %1670 = vmatpush2.msra.mxu0 0.0
    %1671 = vmatprep.subr.mxu0 0.0
    %1672 = vmatpush2.msra.mxu0 0.0
    %1673 = vmatprep.subr.mxu0 0.0
    %1674 = vmatpush2.msra.mxu0 0.0
    %1675 = vmatprep.subr.mxu0 0.0
    %1676 = vmatpush2.msra.mxu0 0.0
    %1677 = vmatprep.mubr.f32.mxu0 0.0
    %1678 = vmatmul.mubr.f32.gmra.mxu0 %v1611
    %v1679 = vpop.f32.mrf.mxu0
    %v1680 = vadd.f32 0.0, %v1679
    %v1681 = vpop.f32.mrf.mxu0
    %1682 = vdwg.mxu0
    %v1683 = vld [vmem:[#allocation2 + $0xa] sm:$0x3]
    %v1684 = vadd.f32 %v1683, %v1605
    %v1685 = vxor.u32 %v1684, 2147483648
    %v1686 = vmul.f32 %v1685, 1.442695
    %v1687 = vpow.pop %v1686
    %v1688 = vadd.f32 %v1687, 1.0
    %v1689 = vrcp.pop %v1688
    %v1690 = vmul.f32 1.0, %v1689
    %v1691 = vtanh.pop %v1684
    %v1692 = vmul.f32 %v1690, %v1431
    %1694 = vrot.lane.b32.xlu0 %v1691, 32
    %v1695 = vpop.permute.xlu0 %1694
    %v1697 = vmul.f32 %v1690, %v1695
    %1699 = vrot.lane.b32.xlu0 %v1697, 32
    %v1700 = vpop.permute.xlu0 %1699
    %v1702 = vadd.f32 %v1692, %v1700
    %v1703 = vtanh.pop %v1702
    %1705 = vrot.lane.b32.xlu0 %v1703, 32
    %v1706 = vpop.permute.xlu0 %1705
    %v1708 = vmul.f32 %v1690, %v1706
    %1710 = vrot.lane.b32.xlu0 %v1708, 64
    %v1711 = vpop.permute.xlu0 %1710
    %v1712 = vsel %vm178, %v1711, 0
    %1714 = vmatprep.subr.mxu0 0.0
    %1715 = vmatpush1.msra.mxu0 0.0
    %1716 = vmatprep.subr.mxu0 0.0
    %1717 = vmatpush1.msra.mxu0 0.0
    %1718 = vmatprep.subr.mxu0 0.0
    %1719 = vmatpush1.msra.mxu0 0.0
    %1720 = vmatprep.subr.mxu0 0.0
    %1721 = vmatpush1.msra.mxu0 0.0
    %1722 = vmatprep.subr.mxu0 0.0
    %1723 = vmatpush1.msra.mxu0 0.0
    %1724 = vmatprep.subr.mxu0 0.0
    %1725 = vmatpush1.msra.mxu0 0.0
    %1726 = vmatprep.subr.mxu0 0.0
    %1727 = vmatpush1.msra.mxu0 0.0
    %1728 = vmatprep.subr.mxu0 0.0
    %1729 = vmatpush1.msra.mxu0 0.0
    %1730 = vmatprep.subr.mxu0 0.0
    %1731 = vmatpush1.msra.mxu0 0.0
    %1732 = vmatprep.subr.mxu0 0.0
    %1733 = vmatpush1.msra.mxu0 0.0
    %1734 = vmatprep.subr.mxu0 0.0
    %1735 = vmatpush1.msra.mxu0 0.0
    %1736 = vmatprep.subr.mxu0 0.0
    %1737 = vmatpush1.msra.mxu0 0.0
    %1738 = vmatprep.subr.mxu0 0.0
    %1739 = vmatpush1.msra.mxu0 %v75
    %1740 = vmatprep.subr.mxu0 0.0
    %1741 = vmatpush1.msra.mxu0 %v74
    %1742 = vmatprep.subr.mxu0 0.0
    %1743 = vmatpush1.msra.mxu0 %v73
    %1744 = vmatprep.subr.mxu0 0.0
    %1745 = vmatpush1.msra.mxu0 %v72
    %1746 = vmatprep.subr.mxu0 0.0
    %1747 = vmatpush2.msra.mxu0 0.0
    %1748 = vmatprep.subr.mxu0 0.0
    %1749 = vmatpush2.msra.mxu0 0.0
    %1750 = vmatprep.subr.mxu0 0.0
    %1751 = vmatpush2.msra.mxu0 0.0
    %1752 = vmatprep.subr.mxu0 0.0
    %1753 = vmatpush2.msra.mxu0 0.0
    %1754 = vmatprep.subr.mxu0 0.0
    %1755 = vmatpush2.msra.mxu0 0.0
    %1756 = vmatprep.subr.mxu0 0.0
    %1757 = vmatpush2.msra.mxu0 0.0
    %1758 = vmatprep.subr.mxu0 0.0
    %1759 = vmatpush2.msra.mxu0 0.0
    %1760 = vmatprep.subr.mxu0 0.0
    %1761 = vmatpush2.msra.mxu0 0.0
    %1762 = vmatprep.subr.mxu0 0.0
    %1763 = vmatpush2.msra.mxu0 0.0
    %1764 = vmatprep.subr.mxu0 0.0
    %1765 = vmatpush2.msra.mxu0 0.0
    %1766 = vmatprep.subr.mxu0 0.0
    %1767 = vmatpush2.msra.mxu0 0.0
    %1768 = vmatprep.subr.mxu0 0.0
    %1769 = vmatpush2.msra.mxu0 0.0
    %1770 = vmatprep.subr.mxu0 0.0
    %1771 = vmatpush2.msra.mxu0 0.0
    %1772 = vmatprep.subr.mxu0 0.0
    %1773 = vmatpush2.msra.mxu0 0.0
    %1774 = vmatprep.subr.mxu0 0.0
    %1775 = vmatpush2.msra.mxu0 0.0
    %1776 = vmatprep.subr.mxu0 0.0
    %1777 = vmatpush2.msra.mxu0 0.0
    %1778 = vmatprep.mubr.f32.mxu0 0.0
    %1779 = vmatmul.mubr.f32.gmra.mxu0 %v1712
    %v1780 = vpop.f32.mrf.mxu0
    %v1781 = vadd.f32 %v1680, %v1780
    %v1782 = vpop.f32.mrf.mxu0
    %1783 = vdwg.mxu0
    %v1784 = vadd.f32 %v1781, %v427
    %v1785 = vxor.u32 %v1784, 2147483648
    %v1786 = vmul.f32 %v1785, 1.442695
    %v1787 = vpow.pop %v1786
    %v1788 = vadd.f32 %v1787, 1.0
    %v1789 = vrcp.pop %v1788
    %v1790 = vmul.f32 1.0, %v1789
    %v1791 = vtanh.pop %v1784
    %v1792 = vmul.f32 %v1790, %v1531
    %1794 = vrot.lane.b32.xlu0 %v1791, 32
    %v1795 = vpop.permute.xlu0 %1794
    %v1797 = vmul.f32 %v1790, %v1795
    %1799 = vrot.lane.b32.xlu0 %v1797, 32
    %v1800 = vpop.permute.xlu0 %1799
    %v1802 = vadd.f32 %v1792, %v1800
    %v1803 = vtanh.pop %v1802
    %1805 = vrot.lane.b32.xlu0 %v1803, 32
    %v1806 = vpop.permute.xlu0 %1805
    %v1808 = vmul.f32 %v1790, %v1806
    %1809 = vmatprep.subr.mxu0 0.0
    %1810 = vmatpush1.msra.mxu0 0.0
    %1811 = vmatprep.subr.mxu0 0.0
    %1812 = vmatpush1.msra.mxu0 0.0
    %1813 = vmatprep.subr.mxu0 0.0
    %1814 = vmatpush1.msra.mxu0 0.0
    %1815 = vmatprep.subr.mxu0 0.0
    %1816 = vmatpush1.msra.mxu0 0.0
    %1817 = vmatprep.subr.mxu0 0.0
    %1818 = vmatpush1.msra.mxu0 0.0
    %1819 = vmatprep.subr.mxu0 0.0
    %1820 = vmatpush1.msra.mxu0 0.0
    %1821 = vmatprep.subr.mxu0 0.0
    %1822 = vmatpush1.msra.mxu0 0.0
    %1823 = vmatprep.subr.mxu0 0.0
    %1824 = vmatpush1.msra.mxu0 0.0
    %1825 = vmatprep.subr.mxu0 0.0
    %1826 = vmatpush1.msra.mxu0 0.0
    %1827 = vmatprep.subr.mxu0 0.0
    %1828 = vmatpush1.msra.mxu0 0.0
    %1829 = vmatprep.subr.mxu0 0.0
    %1830 = vmatpush1.msra.mxu0 0.0
    %1831 = vmatprep.subr.mxu0 0.0
    %1832 = vmatpush1.msra.mxu0 0.0
    %1833 = vmatprep.subr.mxu0 0.0
    %1834 = vmatpush1.msra.mxu0 %v79
    %1835 = vmatprep.subr.mxu0 0.0
    %1836 = vmatpush1.msra.mxu0 %v78
    %1837 = vmatprep.subr.mxu0 0.0
    %1838 = vmatpush1.msra.mxu0 %v77
    %1839 = vmatprep.subr.mxu0 0.0
    %1840 = vmatpush1.msra.mxu0 %v76
    %1841 = vmatprep.subr.mxu0 0.0
    %1842 = vmatpush2.msra.mxu0 0.0
    %1843 = vmatprep.subr.mxu0 0.0
    %1844 = vmatpush2.msra.mxu0 0.0
    %1845 = vmatprep.subr.mxu0 0.0
    %1846 = vmatpush2.msra.mxu0 0.0
    %1847 = vmatprep.subr.mxu0 0.0
    %1848 = vmatpush2.msra.mxu0 0.0
    %1849 = vmatprep.subr.mxu0 0.0
    %1850 = vmatpush2.msra.mxu0 0.0
    %1851 = vmatprep.subr.mxu0 0.0
    %1852 = vmatpush2.msra.mxu0 0.0
    %1853 = vmatprep.subr.mxu0 0.0
    %1854 = vmatpush2.msra.mxu0 0.0
    %1855 = vmatprep.subr.mxu0 0.0
    %1856 = vmatpush2.msra.mxu0 0.0
    %1857 = vmatprep.subr.mxu0 0.0
    %1858 = vmatpush2.msra.mxu0 0.0
    %1859 = vmatprep.subr.mxu0 0.0
    %1860 = vmatpush2.msra.mxu0 0.0
    %1861 = vmatprep.subr.mxu0 0.0
    %1862 = vmatpush2.msra.mxu0 0.0
    %1863 = vmatprep.subr.mxu0 0.0
    %1864 = vmatpush2.msra.mxu0 0.0
    %1865 = vmatprep.subr.mxu0 0.0
    %1866 = vmatpush2.msra.mxu0 0.0
    %1867 = vmatprep.subr.mxu0 0.0
    %1868 = vmatpush2.msra.mxu0 0.0
    %1869 = vmatprep.subr.mxu0 0.0
    %1870 = vmatpush2.msra.mxu0 0.0
    %1871 = vmatprep.subr.mxu0 0.0
    %1872 = vmatpush2.msra.mxu0 0.0
    %1873 = vmatprep.mubr.f32.mxu0 0.0
    %1874 = vmatmul.mubr.f32.gmra.mxu0 %v1712
    %v1875 = vpop.f32.mrf.mxu0
    %v1876 = vadd.f32 0.0, %v1875
    %v1877 = vpop.f32.mrf.mxu0
    %1878 = vdwg.mxu0
    %1880 = vrot.lane.b32.xlu0 %v1808, 64
    %v1881 = vpop.permute.xlu0 %1880
    %v1882 = vsel %vm178, %v1881, 0
    %1884 = vmatprep.subr.mxu0 0.0
    %1885 = vmatpush1.msra.mxu0 0.0
    %1886 = vmatprep.subr.mxu0 0.0
    %1887 = vmatpush1.msra.mxu0 0.0
    %1888 = vmatprep.subr.mxu0 0.0
    %1889 = vmatpush1.msra.mxu0 0.0
    %1890 = vmatprep.subr.mxu0 0.0
    %1891 = vmatpush1.msra.mxu0 0.0
    %1892 = vmatprep.subr.mxu0 0.0
    %1893 = vmatpush1.msra.mxu0 0.0
    %1894 = vmatprep.subr.mxu0 0.0
    %1895 = vmatpush1.msra.mxu0 0.0
    %1896 = vmatprep.subr.mxu0 0.0
    %1897 = vmatpush1.msra.mxu0 0.0
    %1898 = vmatprep.subr.mxu0 0.0
    %1899 = vmatpush1.msra.mxu0 0.0
    %1900 = vmatprep.subr.mxu0 0.0
    %1901 = vmatpush1.msra.mxu0 0.0
    %1902 = vmatprep.subr.mxu0 0.0
    %1903 = vmatpush1.msra.mxu0 0.0
    %1904 = vmatprep.subr.mxu0 0.0
    %1905 = vmatpush1.msra.mxu0 0.0
    %1906 = vmatprep.subr.mxu0 0.0
    %1907 = vmatpush1.msra.mxu0 0.0
    %1908 = vmatprep.subr.mxu0 0.0
    %1909 = vmatpush1.msra.mxu0 %v83
    %1910 = vmatprep.subr.mxu0 0.0
    %1911 = vmatpush1.msra.mxu0 %v82
    %1912 = vmatprep.subr.mxu0 0.0
    %1913 = vmatpush1.msra.mxu0 %v81
    %1914 = vmatprep.subr.mxu0 0.0
    %1915 = vmatpush1.msra.mxu0 %v80
    %1916 = vmatprep.subr.mxu0 0.0
    %1917 = vmatpush2.msra.mxu0 0.0
    %1918 = vmatprep.subr.mxu0 0.0
    %1919 = vmatpush2.msra.mxu0 0.0
    %1920 = vmatprep.subr.mxu0 0.0
    %1921 = vmatpush2.msra.mxu0 0.0
    %1922 = vmatprep.subr.mxu0 0.0
    %1923 = vmatpush2.msra.mxu0 0.0
    %1924 = vmatprep.subr.mxu0 0.0
    %1925 = vmatpush2.msra.mxu0 0.0
    %1926 = vmatprep.subr.mxu0 0.0
    %1927 = vmatpush2.msra.mxu0 0.0
    %1928 = vmatprep.subr.mxu0 0.0
    %1929 = vmatpush2.msra.mxu0 0.0
    %1930 = vmatprep.subr.mxu0 0.0
    %1931 = vmatpush2.msra.mxu0 0.0
    %1932 = vmatprep.subr.mxu0 0.0
    %1933 = vmatpush2.msra.mxu0 0.0
    %1934 = vmatprep.subr.mxu0 0.0
    %1935 = vmatpush2.msra.mxu0 0.0
    %1936 = vmatprep.subr.mxu0 0.0
    %1937 = vmatpush2.msra.mxu0 0.0
    %1938 = vmatprep.subr.mxu0 0.0
    %1939 = vmatpush2.msra.mxu0 0.0
    %1940 = vmatprep.subr.mxu0 0.0
    %1941 = vmatpush2.msra.mxu0 0.0
    %1942 = vmatprep.subr.mxu0 0.0
    %1943 = vmatpush2.msra.mxu0 0.0
    %1944 = vmatprep.subr.mxu0 0.0
    %1945 = vmatpush2.msra.mxu0 0.0
    %1946 = vmatprep.subr.mxu0 0.0
    %1947 = vmatpush2.msra.mxu0 0.0
    %1948 = vmatprep.mubr.f32.mxu0 0.0
    %1949 = vmatmul.mubr.f32.gmra.mxu0 %v1882
    %v1950 = vpop.f32.mrf.mxu0
    %v1951 = vadd.f32 0.0, %v1950
    %v1952 = vpop.f32.mrf.mxu0
    %1953 = vdwg.mxu0
    %v1954 = vld [vmem:[#allocation2 + $0xc] sm:$0x3]
    %v1955 = vadd.f32 %v1954, %v1876
    %v1956 = vxor.u32 %v1955, 2147483648
    %v1957 = vmul.f32 %v1956, 1.442695
    %v1958 = vpow.pop %v1957
    %v1959 = vadd.f32 %v1958, 1.0
    %v1960 = vrcp.pop %v1959
    %v1961 = vmul.f32 1.0, %v1960
    %v1962 = vtanh.pop %v1955
    %v1963 = vmul.f32 %v1961, %v1702
    %1965 = vrot.lane.b32.xlu0 %v1962, 32
    %v1966 = vpop.permute.xlu0 %1965
    %v1968 = vmul.f32 %v1961, %v1966
    %1970 = vrot.lane.b32.xlu0 %v1968, 32
    %v1971 = vpop.permute.xlu0 %1970
    %v1973 = vadd.f32 %v1963, %v1971
    %v1974 = vtanh.pop %v1973
    %1976 = vrot.lane.b32.xlu0 %v1974, 32
    %v1977 = vpop.permute.xlu0 %1976
    %v1979 = vmul.f32 %v1961, %v1977
    %1981 = vrot.lane.b32.xlu0 %v1979, 64
    %v1982 = vpop.permute.xlu0 %1981
    %v1983 = vsel %vm178, %v1982, 0
    %1985 = vmatprep.subr.mxu0 0.0
    %1986 = vmatpush1.msra.mxu0 0.0
    %1987 = vmatprep.subr.mxu0 0.0
    %1988 = vmatpush1.msra.mxu0 0.0
    %1989 = vmatprep.subr.mxu0 0.0
    %1990 = vmatpush1.msra.mxu0 0.0
    %1991 = vmatprep.subr.mxu0 0.0
    %1992 = vmatpush1.msra.mxu0 0.0
    %1993 = vmatprep.subr.mxu0 0.0
    %1994 = vmatpush1.msra.mxu0 0.0
    %1995 = vmatprep.subr.mxu0 0.0
    %1996 = vmatpush1.msra.mxu0 0.0
    %1997 = vmatprep.subr.mxu0 0.0
    %1998 = vmatpush1.msra.mxu0 0.0
    %1999 = vmatprep.subr.mxu0 0.0
    %2000 = vmatpush1.msra.mxu0 0.0
    %2001 = vmatprep.subr.mxu0 0.0
    %2002 = vmatpush1.msra.mxu0 0.0
    %2003 = vmatprep.subr.mxu0 0.0
    %2004 = vmatpush1.msra.mxu0 0.0
    %2005 = vmatprep.subr.mxu0 0.0
    %2006 = vmatpush1.msra.mxu0 0.0
    %2007 = vmatprep.subr.mxu0 0.0
    %2008 = vmatpush1.msra.mxu0 0.0
    %2009 = vmatprep.subr.mxu0 0.0
    %2010 = vmatpush1.msra.mxu0 %v75
    %2011 = vmatprep.subr.mxu0 0.0
    %2012 = vmatpush1.msra.mxu0 %v74
    %2013 = vmatprep.subr.mxu0 0.0
    %2014 = vmatpush1.msra.mxu0 %v73
    %2015 = vmatprep.subr.mxu0 0.0
    %2016 = vmatpush1.msra.mxu0 %v72
    %2017 = vmatprep.subr.mxu0 0.0
    %2018 = vmatpush2.msra.mxu0 0.0
    %2019 = vmatprep.subr.mxu0 0.0
    %2020 = vmatpush2.msra.mxu0 0.0
    %2021 = vmatprep.subr.mxu0 0.0
    %2022 = vmatpush2.msra.mxu0 0.0
    %2023 = vmatprep.subr.mxu0 0.0
    %2024 = vmatpush2.msra.mxu0 0.0
    %2025 = vmatprep.subr.mxu0 0.0
    %2026 = vmatpush2.msra.mxu0 0.0
    %2027 = vmatprep.subr.mxu0 0.0
    %2028 = vmatpush2.msra.mxu0 0.0
    %2029 = vmatprep.subr.mxu0 0.0
    %2030 = vmatpush2.msra.mxu0 0.0
    %2031 = vmatprep.subr.mxu0 0.0
    %2032 = vmatpush2.msra.mxu0 0.0
    %2033 = vmatprep.subr.mxu0 0.0
    %2034 = vmatpush2.msra.mxu0 0.0
    %2035 = vmatprep.subr.mxu0 0.0
    %2036 = vmatpush2.msra.mxu0 0.0
    %2037 = vmatprep.subr.mxu0 0.0
    %2038 = vmatpush2.msra.mxu0 0.0
    %2039 = vmatprep.subr.mxu0 0.0
    %2040 = vmatpush2.msra.mxu0 0.0
    %2041 = vmatprep.subr.mxu0 0.0
    %2042 = vmatpush2.msra.mxu0 0.0
    %2043 = vmatprep.subr.mxu0 0.0
    %2044 = vmatpush2.msra.mxu0 0.0
    %2045 = vmatprep.subr.mxu0 0.0
    %2046 = vmatpush2.msra.mxu0 0.0
    %2047 = vmatprep.subr.mxu0 0.0
    %2048 = vmatpush2.msra.mxu0 0.0
    %2049 = vmatprep.mubr.f32.mxu0 0.0
    %2050 = vmatmul.mubr.f32.gmra.mxu0 %v1983
    %v2051 = vpop.f32.mrf.mxu0
    %v2052 = vadd.f32 %v1951, %v2051
    %v2053 = vpop.f32.mrf.mxu0
    %2054 = vdwg.mxu0
    %v2055 = vadd.f32 %v2052, %v427
    %v2056 = vxor.u32 %v2055, 2147483648
    %v2057 = vmul.f32 %v2056, 1.442695
    %v2058 = vpow.pop %v2057
    %v2059 = vadd.f32 %v2058, 1.0
    %v2060 = vrcp.pop %v2059
    %v2061 = vmul.f32 1.0, %v2060
    %v2062 = vtanh.pop %v2055
    %v2063 = vmul.f32 %v2061, %v1802
    %2065 = vrot.lane.b32.xlu0 %v2062, 32
    %v2066 = vpop.permute.xlu0 %2065
    %v2068 = vmul.f32 %v2061, %v2066
    %2070 = vrot.lane.b32.xlu0 %v2068, 32
    %v2071 = vpop.permute.xlu0 %2070
    %v2073 = vadd.f32 %v2063, %v2071
    %v2074 = vtanh.pop %v2073
    %2076 = vrot.lane.b32.xlu0 %v2074, 32
    %v2077 = vpop.permute.xlu0 %2076
    %v2079 = vmul.f32 %v2061, %v2077
    %2080 = vmatprep.subr.mxu0 0.0
    %2081 = vmatpush1.msra.mxu0 0.0
    %2082 = vmatprep.subr.mxu0 0.0
    %2083 = vmatpush1.msra.mxu0 0.0
    %2084 = vmatprep.subr.mxu0 0.0
    %2085 = vmatpush1.msra.mxu0 0.0
    %2086 = vmatprep.subr.mxu0 0.0
    %2087 = vmatpush1.msra.mxu0 0.0
    %2088 = vmatprep.subr.mxu0 0.0
    %2089 = vmatpush1.msra.mxu0 0.0
    %2090 = vmatprep.subr.mxu0 0.0
    %2091 = vmatpush1.msra.mxu0 0.0
    %2092 = vmatprep.subr.mxu0 0.0
    %2093 = vmatpush1.msra.mxu0 0.0
    %2094 = vmatprep.subr.mxu0 0.0
    %2095 = vmatpush1.msra.mxu0 0.0
    %2096 = vmatprep.subr.mxu0 0.0
    %2097 = vmatpush1.msra.mxu0 0.0
    %2098 = vmatprep.subr.mxu0 0.0
    %2099 = vmatpush1.msra.mxu0 0.0
    %2100 = vmatprep.subr.mxu0 0.0
    %2101 = vmatpush1.msra.mxu0 0.0
    %2102 = vmatprep.subr.mxu0 0.0
    %2103 = vmatpush1.msra.mxu0 0.0
    %2104 = vmatprep.subr.mxu0 0.0
    %2105 = vmatpush1.msra.mxu0 %v79
    %2106 = vmatprep.subr.mxu0 0.0
    %2107 = vmatpush1.msra.mxu0 %v78
    %2108 = vmatprep.subr.mxu0 0.0
    %2109 = vmatpush1.msra.mxu0 %v77
    %2110 = vmatprep.subr.mxu0 0.0
    %2111 = vmatpush1.msra.mxu0 %v76
    %2112 = vmatprep.subr.mxu0 0.0
    %2113 = vmatpush2.msra.mxu0 0.0
    %2114 = vmatprep.subr.mxu0 0.0
    %2115 = vmatpush2.msra.mxu0 0.0
    %2116 = vmatprep.subr.mxu0 0.0
    %2117 = vmatpush2.msra.mxu0 0.0
    %2118 = vmatprep.subr.mxu0 0.0
    %2119 = vmatpush2.msra.mxu0 0.0
    %2120 = vmatprep.subr.mxu0 0.0
    %2121 = vmatpush2.msra.mxu0 0.0
    %2122 = vmatprep.subr.mxu0 0.0
    %2123 = vmatpush2.msra.mxu0 0.0
    %2124 = vmatprep.subr.mxu0 0.0
    %2125 = vmatpush2.msra.mxu0 0.0
    %2126 = vmatprep.subr.mxu0 0.0
    %2127 = vmatpush2.msra.mxu0 0.0
    %2128 = vmatprep.subr.mxu0 0.0
    %2129 = vmatpush2.msra.mxu0 0.0
    %2130 = vmatprep.subr.mxu0 0.0
    %2131 = vmatpush2.msra.mxu0 0.0
    %2132 = vmatprep.subr.mxu0 0.0
    %2133 = vmatpush2.msra.mxu0 0.0
    %2134 = vmatprep.subr.mxu0 0.0
    %2135 = vmatpush2.msra.mxu0 0.0
    %2136 = vmatprep.subr.mxu0 0.0
    %2137 = vmatpush2.msra.mxu0 0.0
    %2138 = vmatprep.subr.mxu0 0.0
    %2139 = vmatpush2.msra.mxu0 0.0
    %2140 = vmatprep.subr.mxu0 0.0
    %2141 = vmatpush2.msra.mxu0 0.0
    %2142 = vmatprep.subr.mxu0 0.0
    %2143 = vmatpush2.msra.mxu0 0.0
    %2144 = vmatprep.mubr.f32.mxu0 0.0
    %2145 = vmatmul.mubr.f32.gmra.mxu0 %v1983
    %v2146 = vpop.f32.mrf.mxu0
    %v2147 = vadd.f32 0.0, %v2146
    %v2148 = vpop.f32.mrf.mxu0
    %2149 = vdwg.mxu0
    %2151 = vrot.lane.b32.xlu0 %v2079, 64
    %v2152 = vpop.permute.xlu0 %2151
    %v2153 = vsel %vm178, %v2152, 0
    %2155 = vmatprep.subr.mxu0 0.0
    %2156 = vmatpush1.msra.mxu0 0.0
    %2157 = vmatprep.subr.mxu0 0.0
    %2158 = vmatpush1.msra.mxu0 0.0
    %2159 = vmatprep.subr.mxu0 0.0
    %2160 = vmatpush1.msra.mxu0 0.0
    %2161 = vmatprep.subr.mxu0 0.0
    %2162 = vmatpush1.msra.mxu0 0.0
    %2163 = vmatprep.subr.mxu0 0.0
    %2164 = vmatpush1.msra.mxu0 0.0
    %2165 = vmatprep.subr.mxu0 0.0
    %2166 = vmatpush1.msra.mxu0 0.0
    %2167 = vmatprep.subr.mxu0 0.0
    %2168 = vmatpush1.msra.mxu0 0.0
    %2169 = vmatprep.subr.mxu0 0.0
    %2170 = vmatpush1.msra.mxu0 0.0
    %2171 = vmatprep.subr.mxu0 0.0
    %2172 = vmatpush1.msra.mxu0 0.0
    %2173 = vmatprep.subr.mxu0 0.0
    %2174 = vmatpush1.msra.mxu0 0.0
    %2175 = vmatprep.subr.mxu0 0.0
    %2176 = vmatpush1.msra.mxu0 0.0
    %2177 = vmatprep.subr.mxu0 0.0
    %2178 = vmatpush1.msra.mxu0 0.0
    %2179 = vmatprep.subr.mxu0 0.0
    %2180 = vmatpush1.msra.mxu0 %v83
    %2181 = vmatprep.subr.mxu0 0.0
    %2182 = vmatpush1.msra.mxu0 %v82
    %2183 = vmatprep.subr.mxu0 0.0
    %2184 = vmatpush1.msra.mxu0 %v81
    %2185 = vmatprep.subr.mxu0 0.0
    %2186 = vmatpush1.msra.mxu0 %v80
    %2187 = vmatprep.subr.mxu0 0.0
    %2188 = vmatpush2.msra.mxu0 0.0
    %2189 = vmatprep.subr.mxu0 0.0
    %2190 = vmatpush2.msra.mxu0 0.0
    %2191 = vmatprep.subr.mxu0 0.0
    %2192 = vmatpush2.msra.mxu0 0.0
    %2193 = vmatprep.subr.mxu0 0.0
    %2194 = vmatpush2.msra.mxu0 0.0
    %2195 = vmatprep.subr.mxu0 0.0
    %2196 = vmatpush2.msra.mxu0 0.0
    %2197 = vmatprep.subr.mxu0 0.0
    %2198 = vmatpush2.msra.mxu0 0.0
    %2199 = vmatprep.subr.mxu0 0.0
    %2200 = vmatpush2.msra.mxu0 0.0
    %2201 = vmatprep.subr.mxu0 0.0
    %2202 = vmatpush2.msra.mxu0 0.0
    %2203 = vmatprep.subr.mxu0 0.0
    %2204 = vmatpush2.msra.mxu0 0.0
    %2205 = vmatprep.subr.mxu0 0.0
    %2206 = vmatpush2.msra.mxu0 0.0
    %2207 = vmatprep.subr.mxu0 0.0
    %2208 = vmatpush2.msra.mxu0 0.0
    %2209 = vmatprep.subr.mxu0 0.0
    %2210 = vmatpush2.msra.mxu0 0.0
    %2211 = vmatprep.subr.mxu0 0.0
    %2212 = vmatpush2.msra.mxu0 0.0
    %2213 = vmatprep.subr.mxu0 0.0
    %2214 = vmatpush2.msra.mxu0 0.0
    %2215 = vmatprep.subr.mxu0 0.0
    %2216 = vmatpush2.msra.mxu0 0.0
    %2217 = vmatprep.subr.mxu0 0.0
    %2218 = vmatpush2.msra.mxu0 0.0
    %2219 = vmatprep.mubr.f32.mxu0 0.0
    %2220 = vmatmul.mubr.f32.gmra.mxu0 %v2153
    %v2221 = vpop.f32.mrf.mxu0
    %v2222 = vadd.f32 0.0, %v2221
    %v2223 = vpop.f32.mrf.mxu0
    %2224 = vdwg.mxu0
    %v2225 = vld [vmem:[#allocation2 + $0xe] sm:$0x3]
    %v2226 = vadd.f32 %v2225, %v2147
    %v2227 = vxor.u32 %v2226, 2147483648
    %v2228 = vmul.f32 %v2227, 1.442695
    %v2229 = vpow.pop %v2228
    %v2230 = vadd.f32 %v2229, 1.0
    %v2231 = vrcp.pop %v2230
    %v2232 = vmul.f32 1.0, %v2231
    %v2233 = vtanh.pop %v2226
    %v2234 = vmul.f32 %v2232, %v1973
    %2236 = vrot.lane.b32.xlu0 %v2233, 32
    %v2237 = vpop.permute.xlu0 %2236
    %v2239 = vmul.f32 %v2232, %v2237
    %2241 = vrot.lane.b32.xlu0 %v2239, 32
    %v2242 = vpop.permute.xlu0 %2241
    %v2244 = vadd.f32 %v2234, %v2242
    %v2245 = vtanh.pop %v2244
    %2247 = vrot.lane.b32.xlu0 %v2245, 32
    %v2248 = vpop.permute.xlu0 %2247
    %v2250 = vmul.f32 %v2232, %v2248
    %2252 = vrot.lane.b32.xlu0 %v2250, 64
    %v2253 = vpop.permute.xlu0 %2252
    %v2254 = vsel %vm178, %v2253, 0
    %2256 = vmatprep.subr.mxu0 0.0
    %2257 = vmatpush1.msra.mxu0 0.0
    %2258 = vmatprep.subr.mxu0 0.0
    %2259 = vmatpush1.msra.mxu0 0.0
    %2260 = vmatprep.subr.mxu0 0.0
    %2261 = vmatpush1.msra.mxu0 0.0
    %2262 = vmatprep.subr.mxu0 0.0
    %2263 = vmatpush1.msra.mxu0 0.0
    %2264 = vmatprep.subr.mxu0 0.0
    %2265 = vmatpush1.msra.mxu0 0.0
    %2266 = vmatprep.subr.mxu0 0.0
    %2267 = vmatpush1.msra.mxu0 0.0
    %2268 = vmatprep.subr.mxu0 0.0
    %2269 = vmatpush1.msra.mxu0 0.0
    %2270 = vmatprep.subr.mxu0 0.0
    %2271 = vmatpush1.msra.mxu0 0.0
    %2272 = vmatprep.subr.mxu0 0.0
    %2273 = vmatpush1.msra.mxu0 0.0
    %2274 = vmatprep.subr.mxu0 0.0
    %2275 = vmatpush1.msra.mxu0 0.0
    %2276 = vmatprep.subr.mxu0 0.0
    %2277 = vmatpush1.msra.mxu0 0.0
    %2278 = vmatprep.subr.mxu0 0.0
    %2279 = vmatpush1.msra.mxu0 0.0
    %2280 = vmatprep.subr.mxu0 0.0
    %2281 = vmatpush1.msra.mxu0 %v75
    %2282 = vmatprep.subr.mxu0 0.0
    %2283 = vmatpush1.msra.mxu0 %v74
    %2284 = vmatprep.subr.mxu0 0.0
    %2285 = vmatpush1.msra.mxu0 %v73
    %2286 = vmatprep.subr.mxu0 0.0
    %2287 = vmatpush1.msra.mxu0 %v72
    %2288 = vmatprep.subr.mxu0 0.0
    %2289 = vmatpush2.msra.mxu0 0.0
    %2290 = vmatprep.subr.mxu0 0.0
    %2291 = vmatpush2.msra.mxu0 0.0
    %2292 = vmatprep.subr.mxu0 0.0
    %2293 = vmatpush2.msra.mxu0 0.0
    %2294 = vmatprep.subr.mxu0 0.0
    %2295 = vmatpush2.msra.mxu0 0.0
    %2296 = vmatprep.subr.mxu0 0.0
    %2297 = vmatpush2.msra.mxu0 0.0
    %2298 = vmatprep.subr.mxu0 0.0
    %2299 = vmatpush2.msra.mxu0 0.0
    %2300 = vmatprep.subr.mxu0 0.0
    %2301 = vmatpush2.msra.mxu0 0.0
    %2302 = vmatprep.subr.mxu0 0.0
    %2303 = vmatpush2.msra.mxu0 0.0
    %2304 = vmatprep.subr.mxu0 0.0
    %2305 = vmatpush2.msra.mxu0 0.0
    %2306 = vmatprep.subr.mxu0 0.0
    %2307 = vmatpush2.msra.mxu0 0.0
    %2308 = vmatprep.subr.mxu0 0.0
    %2309 = vmatpush2.msra.mxu0 0.0
    %2310 = vmatprep.subr.mxu0 0.0
    %2311 = vmatpush2.msra.mxu0 0.0
    %2312 = vmatprep.subr.mxu0 0.0
    %2313 = vmatpush2.msra.mxu0 0.0
    %2314 = vmatprep.subr.mxu0 0.0
    %2315 = vmatpush2.msra.mxu0 0.0
    %2316 = vmatprep.subr.mxu0 0.0
    %2317 = vmatpush2.msra.mxu0 0.0
    %2318 = vmatprep.subr.mxu0 0.0
    %2319 = vmatpush2.msra.mxu0 0.0
    %2320 = vmatprep.mubr.f32.mxu0 0.0
    %2321 = vmatmul.mubr.f32.gmra.mxu0 %v2254
    %v2322 = vpop.f32.mrf.mxu0
    %v2323 = vadd.f32 %v2222, %v2322
    %v2324 = vpop.f32.mrf.mxu0
    %2325 = vdwg.mxu0
    %v2326 = vadd.f32 %v2323, %v427
    %v2327 = vxor.u32 %v2326, 2147483648
    %v2328 = vmul.f32 %v2327, 1.442695
    %v2329 = vpow.pop %v2328
    %v2330 = vadd.f32 %v2329, 1.0
    %v2331 = vrcp.pop %v2330
    %v2332 = vmul.f32 1.0, %v2331
    %v2333 = vtanh.pop %v2326
    %v2334 = vmul.f32 %v2332, %v2073
    %2336 = vrot.lane.b32.xlu0 %v2333, 32
    %v2337 = vpop.permute.xlu0 %2336
    %v2339 = vmul.f32 %v2332, %v2337
    %2341 = vrot.lane.b32.xlu0 %v2339, 32
    %v2342 = vpop.permute.xlu0 %2341
    %v2344 = vadd.f32 %v2334, %v2342
    %v2345 = vtanh.pop %v2344
    %2347 = vrot.lane.b32.xlu0 %v2345, 32
    %v2348 = vpop.permute.xlu0 %2347
    %v2350 = vmul.f32 %v2332, %v2348
    %v2351 = vld [vmem:[%s7] sm:$0xff]
    %v2352 = vld [vmem:[%s7 + $0x8] sm:$0xff]
    %v2353 = vld [vmem:[%s7 + $0x10] sm:$0xff]
    %v2354 = vld [vmem:[%s7 + $0x18] sm:$0xff]
    %v2355 = vld [vmem:[#allocation8] sm:$0x1]
    %v2357 = vlaneseq
    %v2358 = vshrl.u32 %v2357, 7
    %v2359 = vsub.s32 0, %v2358
    %v2360 = vrot.slane %v2355, %v2359
    %2363 = vrot.lane.b32.xlu0 %v2350, 64
    %v2364 = vpop.permute.xlu0 %2363
    %v2365 = vsel %vm178, %v2364, 0
    %2367 = vmatprep.subr.mxu0 0.0
    %2368 = vmatpush1.msra.mxu0 0.0
    %2369 = vmatprep.subr.mxu0 0.0
    %2370 = vmatpush1.msra.mxu0 0.0
    %2371 = vmatprep.subr.mxu0 0.0
    %2372 = vmatpush1.msra.mxu0 0.0
    %2373 = vmatprep.subr.mxu0 0.0
    %2374 = vmatpush1.msra.mxu0 0.0
    %2375 = vmatprep.subr.mxu0 0.0
    %2376 = vmatpush1.msra.mxu0 0.0
    %2377 = vmatprep.subr.mxu0 0.0
    %2378 = vmatpush1.msra.mxu0 0.0
    %2379 = vmatprep.subr.mxu0 0.0
    %2380 = vmatpush1.msra.mxu0 0.0
    %2381 = vmatprep.subr.mxu0 0.0
    %2382 = vmatpush1.msra.mxu0 0.0
    %2383 = vmatprep.subr.mxu0 0.0
    %2384 = vmatpush1.msra.mxu0 0.0
    %2385 = vmatprep.subr.mxu0 0.0
    %2386 = vmatpush1.msra.mxu0 0.0
    %2387 = vmatprep.subr.mxu0 0.0
    %2388 = vmatpush1.msra.mxu0 0.0
    %2389 = vmatprep.subr.mxu0 0.0
    %2390 = vmatpush1.msra.mxu0 0.0
    %2391 = vmatprep.subr.mxu0 0.0
    %2392 = vmatpush1.msra.mxu0 %v2354
    %2393 = vmatprep.subr.mxu0 0.0
    %2394 = vmatpush1.msra.mxu0 %v2353
    %2395 = vmatprep.subr.mxu0 0.0
    %2396 = vmatpush1.msra.mxu0 %v2352
    %2397 = vmatprep.subr.mxu0 0.0
    %2398 = vmatpush1.msra.mxu0 %v2351
    %2399 = vmatprep.subr.mxu0 0.0
    %2400 = vmatpush2.msra.mxu0 0.0
    %2401 = vmatprep.subr.mxu0 0.0
    %2402 = vmatpush2.msra.mxu0 0.0
    %2403 = vmatprep.subr.mxu0 0.0
    %2404 = vmatpush2.msra.mxu0 0.0
    %2405 = vmatprep.subr.mxu0 0.0
    %2406 = vmatpush2.msra.mxu0 0.0
    %2407 = vmatprep.subr.mxu0 0.0
    %2408 = vmatpush2.msra.mxu0 0.0
    %2409 = vmatprep.subr.mxu0 0.0
    %2410 = vmatpush2.msra.mxu0 0.0
    %2411 = vmatprep.subr.mxu0 0.0
    %2412 = vmatpush2.msra.mxu0 0.0
    %2413 = vmatprep.subr.mxu0 0.0
    %2414 = vmatpush2.msra.mxu0 0.0
    %2415 = vmatprep.subr.mxu0 0.0
    %2416 = vmatpush2.msra.mxu0 0.0
    %2417 = vmatprep.subr.mxu0 0.0
    %2418 = vmatpush2.msra.mxu0 0.0
    %2419 = vmatprep.subr.mxu0 0.0
    %2420 = vmatpush2.msra.mxu0 0.0
    %2421 = vmatprep.subr.mxu0 0.0
    %2422 = vmatpush2.msra.mxu0 0.0
    %2423 = vmatprep.subr.mxu0 0.0
    %2424 = vmatpush2.msra.mxu0 0.0
    %2425 = vmatprep.subr.mxu0 0.0
    %2426 = vmatpush2.msra.mxu0 0.0
    %2427 = vmatprep.subr.mxu0 0.0
    %2428 = vmatpush2.msra.mxu0 0.0
    %2429 = vmatprep.subr.mxu0 0.0
    %2430 = vmatpush2.msra.mxu0 0.0
    %2431 = vmatprep.mubr.f32.mxu0 0.0
    %2432 = vmatmul.mubr.f32.gmra.mxu0 %v2365
    %v2433 = vpop.f32.mrf.mxu0
    %v2434 = vadd.f32 %v2360, %v2433
    %v2435 = vpop.f32.mrf.mxu0
    %2436 = vdwg.mxu0
    %vm2437 = vcmask 58368
    %2438 = vst.msk [vmem:[#allocation9] sm:$0x3] %vm2437, %v2434
    // Predicated region
    $region50: #{lstm_model_forward.1} parent=1 // pred_check
      _
    $region51: #{lstm_model_forward.1} parent=1 // pred_check_branch
      %2440 = sbr.rel (0) target = $region53
    $region52: #{lstm_model_forward.1} parent=1 // pred_region
      %s2442 = ssub.s32 32, 32
      %2443 = vsyncadd [#allocation5], %s2442
      %s2445 = sshll.u32 [#allocation9], 4
      %s2446 = int_to_ptr.vmem [resolvable:$true] %s2445
      %2448 = dma.vmem_to_hbm [thread:$0]  %s2446, 32, %s9, [#allocation5]
    $region53: #{lstm_model_forward.1} parent=1 // pred_fallthru
      _
    // Predicated region
    $region54: #{lstm_model_forward.1} parent=1 // pred_check
      _
    $region55: #{lstm_model_forward.1} parent=1 // pred_check_branch
      %2450 = sbr.rel (0) target = $region57
    $region56: #{lstm_model_forward.1} parent=1 // pred_region
      %2451 = dma.done [#allocation5], 32
    $region57: #{lstm_model_forward.1} parent=1 // pred_fallthru
      _
    %2452 = vsyncpa [#allocation4], 1
    %2453 = vsyncpa [#allocation7], 1
    %2454 = vsyncpa [#allocation5], 1

</llo_original>
